<compile_context>
chip_gen: v7x
topology: tpu7x:2x2x1
jax: 0.10.0
libtpu: 0.0.40
codegen_flags: <defaults>
</compile_context>

<pallas_src>
import functools

import numpy as np

import jax
import jax.numpy as jnp
from jax.experimental import pallas as pl
from jax.experimental.pallas import tpu as pltpu


def _round_up(x, m):
    return ((x + m - 1) // m) * m


def _pad_to(a, shape):
    return jnp.pad(a, [(0, t - s) for s, t in zip(a.shape, shape)])


# ----------------------------------------------------------------------------
# Fused forward kernel, one batch tile (bm rows) per grid step.
#   x_ref   : (bm, N*D)   f32   input tile (flattened instance*feature lanes)
#   e1w/e1b : (D, Hp) bf16 / (1, Hp) f32        Linear(D->H)
#   e2w/e2b : (N*Hp, Hp) bf16 / (1, Hp) f32     Linear(N*H->H), flat K
#   d1w/d1b : (Hp, N*Hp) bf16 / (1, N*Hp) f32   Linear(H->N*H), flat out
#   d2w/d2b : (Hp, D) bf16 / (1, D) f32         Linear(H->D)
#   outputs : x_rec (bm, N*D) f32, z (bm, Hp) f32, loss partial (1, 1, 128) f32
#   scratch : h_scr (bm, N*Hp) bf16  (flattened encoder activations)
# ----------------------------------------------------------------------------
def _fused_ae_kernel(x_ref, e1w_ref, e1b_ref, e2w_ref, e2b_ref,
                     d1w_ref, d1b_ref, d2w_ref, d2b_ref,
                     xrec_ref, z_ref, loss_ref, h_scr,
                     *, n_inst, n_dim, batch_valid):
    bm = x_ref.shape[0]
    hp = z_ref.shape[1]
    n, d = n_inst, n_dim

    # ---- encoder stage 1: per-instance Linear(D->H)+ReLU written into the
    #      flat (bm, N*Hp) scratch at 128-aligned lane offsets (no relayout).
    for j in range(n):
        xj = x_ref[:, j * d:(j + 1) * d].astype(jnp.bfloat16)          # (bm, D)
        hj = jnp.dot(xj, e1w_ref[...], preferred_element_type=jnp.float32)
        hj = jnp.maximum(hj + e1b_ref[...], 0.0)                       # f32 epilogue
        h_scr[:, j * hp:(j + 1) * hp] = hj.astype(jnp.bfloat16)

    # ---- encoder stage 2: ONE deep matmul, K = N*Hp (fills the 256-deep MXU).
    z = jnp.dot(h_scr[...], e2w_ref[...], preferred_element_type=jnp.float32)
    z = jnp.maximum(z + e2b_ref[...], 0.0)
    z_ref[...] = z

    # ---- decoder stage 1: ONE wide matmul producing all instances' g.
    g = jnp.dot(z.astype(jnp.bfloat16), d1w_ref[...],
                preferred_element_type=jnp.float32)
    g = jnp.maximum(g + d1b_ref[...], 0.0)                             # (bm, N*Hp)

    # ---- decoder stage 2: per-instance Linear(H->D), lane-concat to a dense
    #      (bm, N*D) block -> one unmasked full-block store.
    recs = []
    for j in range(n):
        gj = g[:, j * hp:(j + 1) * hp].astype(jnp.bfloat16)
        rj = jnp.dot(gj, d2w_ref[...], preferred_element_type=jnp.float32)
        recs.append(rj + d2b_ref[...])
    rec = jnp.concatenate(recs, axis=-1)                               # (bm, N*D)
    xrec_ref[...] = rec

    # ---- fused MSE(reduction='sum'); batch-pad rows (>= batch_valid) masked.
    row0 = pl.program_id(0) * bm
    rows = jax.lax.broadcasted_iota(jnp.int32, (bm, 1), 0) + row0
    valid = (rows < batch_valid).astype(jnp.float32)
    diff = (rec - x_ref[...]) * valid
    loss_ref[...] = jnp.broadcast_to(jnp.sum(diff * diff),
                                     (1, 1, 128)).astype(jnp.float32)


# ----------------------------------------------------------------------------
# Encode-only kernel (for transform): skips the decoder and the x_rec stream.
# ----------------------------------------------------------------------------
def _encode_kernel(x_ref, e1w_ref, e1b_ref, e2w_ref, e2b_ref,
                   z_ref, h_scr, *, n_inst, n_dim):
    hp = z_ref.shape[1]
    n, d = n_inst, n_dim
    for j in range(n):
        xj = x_ref[:, j * d:(j + 1) * d].astype(jnp.bfloat16)
        hj = jnp.dot(xj, e1w_ref[...], preferred_element_type=jnp.float32)
        hj = jnp.maximum(hj + e1b_ref[...], 0.0)
        h_scr[:, j * hp:(j + 1) * hp] = hj.astype(jnp.bfloat16)
    z = jnp.dot(h_scr[...], e2w_ref[...], preferred_element_type=jnp.float32)
    z_ref[...] = jnp.maximum(z + e2b_ref[...], 0.0)


# ----------------------------------------------------------------------------
# Wrapper: parameter setup, lane-blocked weight packing, batch tiling.
# ----------------------------------------------------------------------------
class AutoEncoderPallas:
    def __init__(self, input_dim, hidden_dim=32, key=None, block_rows=512):
        self.n_instance, self.n_dim = input_dim
        self.hidden_dim = hidden_dim
        self.embed_dim = hidden_dim
        self.block_rows = block_rows
        self.h_pad = _round_up(hidden_dim, 128)
        if key is None:
            key = jax.random.PRNGKey(0)
        ks = jax.random.split(key, 8)
        n, d, h = self.n_instance, self.n_dim, hidden_dim
        s = 0.05  # deterministic small-scale init (synthetic weights)

        # logical (PyTorch-shaped) f32 parameters
        w1 = s * jax.random.normal(ks[0], (d, h), jnp.float32)      # enc Linear(d->h)
        b1 = s * jax.random.normal(ks[1], (1, h), jnp.float32)
        w2 = s * jax.random.normal(ks[2], (n * h, h), jnp.float32)  # enc Linear(n*h->h)
        b2 = s * jax.random.normal(ks[3], (1, h), jnp.float32)
        v1 = s * jax.random.normal(ks[4], (h, n * h), jnp.float32)  # dec Linear(h->n*h)
        c1 = s * jax.random.normal(ks[5], (1, n * h), jnp.float32)
        wd2 = s * jax.random.normal(ks[6], (h, d), jnp.float32)     # dec Linear(h->d)
        bd2 = s * jax.random.normal(ks[7], (1, d), jnp.float32)
        self.params_f32 = dict(w1=w1, b1=b1, w2=w2, b2=b2,
                               v1=v1, c1=c1, wd2=wd2, bd2=bd2)

        hp = self.h_pad
        # bf16 matmul weights: hidden side padded to 128 lanes (exact: padded
        # entries are zero so padded activation columns are exactly zero);
        # the D side is kept at its true size (no HBM/feature-dim padding).
        self.enc1_w = _pad_to(w1, (d, hp)).astype(jnp.bfloat16)                 # (D, Hp)
        self.enc1_b = _pad_to(b1, (1, hp))                                      # f32
        self.enc2_w = _pad_to(w2.reshape(n, h, h),
                              (n, hp, hp)).reshape(n * hp, hp).astype(jnp.bfloat16)
        self.enc2_b = _pad_to(b2, (1, hp))
        self.dec1_w = _pad_to(v1.reshape(h, n, h),
                              (hp, n, hp)).reshape(hp, n * hp).astype(jnp.bfloat16)
        self.dec1_b = _pad_to(c1.reshape(1, n, h), (1, n, hp)).reshape(1, n * hp)
        self.dec2_w = _pad_to(wd2, (hp, d)).astype(jnp.bfloat16)                # (Hp, D)
        self.dec2_b = bd2                                                       # (1, D)

    # adaptive batch tiling: 8-aligned rows, balanced tiles (small tail pad).
    def _tiles(self, B):
        B8 = _round_up(max(B, 1), 8)
        if B8 <= self.block_rows:
            bm, num_tiles = B8, 1
        else:
            num_tiles = pl.cdiv(B, self.block_rows)
            bm = _round_up(pl.cdiv(B, num_tiles), 8)
        return bm, bm * num_tiles, num_tiles

    def processing(self, x):
        return x.astype(jnp.float32)

    def forward(self, x):
        x = self.processing(x)
        B, N, D = x.shape
        assert N == self.n_instance and D == self.n_dim
        hp = self.h_pad
        nd = N * D
        bm, Bp, num_tiles = self._tiles(B)

        # (B, N, D) -> (B, N*D) is a contiguous merge: free, no relayout.
        xf = jnp.reshape(x, (B, nd))
        if Bp != B:
            xf = jnp.pad(xf, ((0, Bp - B), (0, 0)))

        w_bytes = sum(int(a.size) * a.dtype.itemsize for a in
                      (self.enc1_w, self.enc1_b, self.enc2_w, self.enc2_b,
                       self.dec1_w, self.dec1_b, self.dec2_w, self.dec2_b))
        mm_flops = 4 * Bp * N * hp * (D + hp)
        bytes_accessed = int(2 * Bp * nd * 4 + Bp * hp * 4 + w_bytes)

        kernel = functools.partial(_fused_ae_kernel,
                                   n_inst=N, n_dim=D, batch_valid=B)
        xr_f, z_pad, loss_parts = pl.pallas_call(
            kernel,
            out_shape=(
                jax.ShapeDtypeStruct((Bp, nd), jnp.float32),             # x_rec (flat)
                jax.ShapeDtypeStruct((Bp, hp), jnp.float32),             # z
                jax.ShapeDtypeStruct((num_tiles, 1, 128), jnp.float32),  # loss partials
            ),
            grid_spec=pltpu.PrefetchScalarGridSpec(
                num_scalar_prefetch=0,
                grid=(num_tiles,),
                in_specs=[
                    pl.BlockSpec((bm, nd), lambda i: (i, 0)),        # x tile
                    pl.BlockSpec((D, hp), lambda i: (0, 0)),         # enc1_w (resident)
                    pl.BlockSpec((1, hp), lambda i: (0, 0)),         # enc1_b
                    pl.BlockSpec((N * hp, hp), lambda i: (0, 0)),    # enc2_w (flat K)
                    pl.BlockSpec((1, hp), lambda i: (0, 0)),         # enc2_b
                    pl.BlockSpec((hp, N * hp), lambda i: (0, 0)),    # dec1_w (flat out)
                    pl.BlockSpec((1, N * hp), lambda i: (0, 0)),     # dec1_b
                    pl.BlockSpec((hp, D), lambda i: (0, 0)),         # dec2_w
                    pl.BlockSpec((1, D), lambda i: (0, 0)),          # dec2_b
                ],
                out_specs=[
                    pl.BlockSpec((bm, nd), lambda i: (i, 0)),
                    pl.BlockSpec((bm, hp), lambda i: (i, 0)),
                    pl.BlockSpec((1, 1, 128), lambda i: (i, 0, 0)),
                ],
                scratch_shapes=[pltpu.VMEM((bm, N * hp), jnp.bfloat16)],
            ),
            compiler_params=pltpu.CompilerParams(
                dimension_semantics=("parallel",),
                vmem_limit_bytes=48 * 1024 * 1024,   # <= ~48 MB: safe on v7x 64 MiB
            ),
            cost_estimate=pl.CostEstimate(
                flops=int(mm_flops), transcendentals=0,
                bytes_accessed=bytes_accessed),
        )(xf, self.enc1_w, self.enc1_b, self.enc2_w, self.enc2_b,
          self.dec1_w, self.dec1_b, self.dec2_w, self.dec2_b)

        x_rec = jnp.reshape(xr_f[:B], (B, N, D))
        z = z_pad[:B, :self.hidden_dim]
        loss = jnp.sum(loss_parts[:, 0, 0])
        return x_rec, z, loss

    def transform(self, x):
        # encode(processing(x)) only: no decoder matmuls, no x_rec HBM stream.
        x = self.processing(x)
        B, N, D = x.shape
        assert N == self.n_instance and D == self.n_dim
        hp = self.h_pad
        nd = N * D
        bm, Bp, num_tiles = self._tiles(B)
        xf = jnp.reshape(x, (B, nd))
        if Bp != B:
            xf = jnp.pad(xf, ((0, Bp - B), (0, 0)))

        kernel = functools.partial(_encode_kernel, n_inst=N, n_dim=D)
        z_pad = pl.pallas_call(
            kernel,
            out_shape=jax.ShapeDtypeStruct((Bp, hp), jnp.float32),
            grid_spec=pltpu.PrefetchScalarGridSpec(
                num_scalar_prefetch=0,
                grid=(num_tiles,),
                in_specs=[
                    pl.BlockSpec((bm, nd), lambda i: (i, 0)),
                    pl.BlockSpec((D, hp), lambda i: (0, 0)),
                    pl.BlockSpec((1, hp), lambda i: (0, 0)),
                    pl.BlockSpec((N * hp, hp), lambda i: (0, 0)),
                    pl.BlockSpec((1, hp), lambda i: (0, 0)),
                ],
                out_specs=pl.BlockSpec((bm, hp), lambda i: (i, 0)),
                scratch_shapes=[pltpu.VMEM((bm, N * hp), jnp.bfloat16)],
            ),
            compiler_params=pltpu.CompilerParams(
                dimension_semantics=("parallel",),
                vmem_limit_bytes=48 * 1024 * 1024,
            ),
        )(xf, self.enc1_w, self.enc1_b, self.enc2_w, self.enc2_b)
        return z_pad[:B, :self.hidden_dim]


# ----------------------------------------------------------------------------
# Pure-JAX reference of the same canonical forward (f32), for validation.
# ----------------------------------------------------------------------------
def _reference_forward(p, x):
    B, N, D = x.shape
    H = p["w1"].shape[1]
    h = jax.nn.relu(x.reshape(B * N, D) @ p["w1"] + p["b1"]).reshape(B, N * H)
    z = jax.nn.relu(h @ p["w2"] + p["b2"])
    g = jax.nn.relu(z @ p["v1"] + p["c1"]).reshape(B * N, H)
    xr = (g @ p["wd2"] + p["bd2"]).reshape(B, N, D)
    loss = jnp.sum((xr - x) ** 2)
    return xr, z, loss


# ----------------------------------------------------------------------------
if __name__ == "__main__":
    key = jax.random.PRNGKey(0)
    k_x, k_x2, k_p = jax.random.split(key, 3)

    batch, n_instance, n_dim, hidden = 2, 8, 32, 32
    model = AutoEncoderPallas((n_instance, n_dim), hidden_dim=hidden, key=k_p)

    # --- small run (single batch tile) ---
    x = jax.random.normal(k_x, (batch, n_instance, n_dim), dtype=jnp.float32)
    x_rec, z, loss = model.forward(x)
    jax.block_until_ready((x_rec, z, loss))
    assert x_rec.shape == (batch, n_instance, n_dim)
    assert z.shape == (batch, hidden)
    assert loss.shape == ()

    ref_xr, ref_z, ref_loss = _reference_forward(model.params_f32, x)
    np.testing.assert_allclose(np.asarray(x_rec), np.asarray(ref_xr), rtol=5e-2, atol=5e-3)
    np.testing.assert_allclose(np.asarray(z), np.asarray(ref_z), rtol=5e-2, atol=5e-3)
    np.testing.assert_allclose(float(loss), float(ref_loss), rtol=2e-2)

    # --- encode-only path (transform) ---
    z_t = model.transform(x)
    jax.block_until_ready(z_t)
    assert z_t.shape == (batch, hidden)
    np.testing.assert_allclose(np.asarray(z_t), np.asarray(ref_z), rtol=5e-2, atol=5e-3)

    # --- multi-tile run (exercises the batch-tiled parallel grid + pad mask) ---
    model.block_rows = 8
    x_big = jax.random.normal(k_x2, (20, n_instance, n_dim), dtype=jnp.float32)
    x_rec2, z2, loss2 = model.forward(x_big)
    jax.block_until_ready((x_rec2, z2, loss2))
    assert x_rec2.shape == (20, n_instance, n_dim)
    ref_xr2, ref_z2, ref_loss2 = _reference_forward(model.params_f32, x_big)
    np.testing.assert_allclose(np.asarray(x_rec2), np.asarray(ref_xr2), rtol=5e-2, atol=5e-3)
    np.testing.assert_allclose(float(loss2), float(ref_loss2), rtol=2e-2)

    print("KERNEL_OK")
</pallas_src>

<mosaic_0001>
module attributes {stable_mosaic.version = 11 : i64} {
  func.func @_fused_ae_kernel(%arg0: i32, %arg1: memref<8x256xf32, #tpu.memory_space<vmem>>, %arg2: memref<32x128xbf16, #tpu.memory_space<vmem>>, %arg3: memref<1x128xf32, #tpu.memory_space<vmem>>, %arg4: memref<1024x128xbf16, #tpu.memory_space<vmem>>, %arg5: memref<1x128xf32, #tpu.memory_space<vmem>>, %arg6: memref<128x1024xbf16, #tpu.memory_space<vmem>>, %arg7: memref<1x1024xf32, #tpu.memory_space<vmem>>, %arg8: memref<128x32xbf16, #tpu.memory_space<vmem>>, %arg9: memref<1x32xf32, #tpu.memory_space<vmem>>, %arg10: memref<8x256xf32, #tpu.memory_space<vmem>>, %arg11: memref<8x128xf32, #tpu.memory_space<vmem>>, %arg12: memref<1x1x128xf32, #tpu.memory_space<vmem>>, %arg13: memref<8x1024xbf16, #tpu.memory_space<vmem>>) attributes {dimension_semantics = [#tpu.dimension_semantics<parallel>], iteration_bounds = array<i64: 1>, scalar_prefetch = 0 : i64, scratch_operands = 1 : i64, tpu.core_type = #tpu.core_type<tc>, window_params = [{transform_indices = @transform_0, window_bounds = array<i64: 8, 256>}, {pipeline_mode = #tpu.pipeline_mode<synchronous>, transform_indices = @transform_1, window_bounds = array<i64: 32, 128>}, {pipeline_mode = #tpu.pipeline_mode<synchronous>, transform_indices = @transform_2, window_bounds = array<i64: 1, 128>}, {pipeline_mode = #tpu.pipeline_mode<synchronous>, transform_indices = @transform_3, window_bounds = array<i64: 1024, 128>}, {pipeline_mode = #tpu.pipeline_mode<synchronous>, transform_indices = @transform_4, window_bounds = array<i64: 1, 128>}, {pipeline_mode = #tpu.pipeline_mode<synchronous>, transform_indices = @transform_5, window_bounds = array<i64: 128, 1024>}, {pipeline_mode = #tpu.pipeline_mode<synchronous>, transform_indices = @transform_6, window_bounds = array<i64: 1, 1024>}, {pipeline_mode = #tpu.pipeline_mode<synchronous>, transform_indices = @transform_7, window_bounds = array<i64: 128, 32>}, {pipeline_mode = #tpu.pipeline_mode<synchronous>, transform_indices = @transform_8, window_bounds = array<i64: 1, 32>}, {transform_indices = @transform_9, window_bounds = array<i64: 8, 256>}, {transform_indices = @transform_10, window_bounds = array<i64: 8, 128>}, {transform_indices = @transform_11, window_bounds = array<i64: 1, 1, 128>}]} {
    %c0 = arith.constant 0 : index
    %c0_0 = arith.constant 0 : index
    %0 = vector.load %arg1[%c0, %c0_0] : memref<8x256xf32, #tpu.memory_space<vmem>>, vector<8x32xf32>
    %1 = arith.truncf %0 : vector<8x32xf32> to vector<8x32xbf16>
    %c0_1 = arith.constant 0 : index
    %c0_2 = arith.constant 0 : index
    %2 = vector.load %arg2[%c0_1, %c0_2] : memref<32x128xbf16, #tpu.memory_space<vmem>>, vector<32x128xbf16>
    %cst = arith.constant dense<0.000000e+00> : vector<8x128xf32>
    %3 = tpu.matmul %1, %2, %cst {dimension_numbers = #tpu.dot_dimension_numbers<[1], [0], [0], [1], [0, 0, 1, 1], [], []>} : vector<8x32xbf16>, vector<32x128xbf16>, vector<8x128xf32> -> vector<8x128xf32>
    %c0_3 = arith.constant 0 : index
    %c0_4 = arith.constant 0 : index
    %4 = vector.load %arg3[%c0_3, %c0_4] : memref<1x128xf32, #tpu.memory_space<vmem>>, vector<1x128xf32>
    %5 = vector.broadcast %4 : vector<1x128xf32> to vector<8x128xf32>
    %6 = arith.addf %3, %5 : vector<8x128xf32>
    %cst_5 = arith.constant 0.000000e+00 : f32
    %7 = vector.broadcast %cst_5 : f32 to vector<8x128xf32>
    %8 = arith.maximumf %6, %7 : vector<8x128xf32>
    %9 = arith.truncf %8 : vector<8x128xf32> to vector<8x128xbf16>
    %c0_6 = arith.constant 0 : index
    %c0_7 = arith.constant 0 : index
    %10 = vector.load %arg13[%c0_6, %c0_7] : memref<8x1024xbf16, #tpu.memory_space<vmem>>, vector<8x128xbf16>
    tpu.vector_store %arg13[%c0_6, %c0_7], %9 {strides = array<i32>} : memref<8x1024xbf16, #tpu.memory_space<vmem>>, vector<8x128xbf16>,
    %c0_8 = arith.constant 0 : index
    %c32 = arith.constant 32 : index
    %11 = vector.load %arg1[%c0_8, %c32] : memref<8x256xf32, #tpu.memory_space<vmem>>, vector<8x32xf32>
    %12 = arith.truncf %11 : vector<8x32xf32> to vector<8x32xbf16>
    %c0_9 = arith.constant 0 : index
    %c0_10 = arith.constant 0 : index
    %13 = vector.load %arg2[%c0_9, %c0_10] : memref<32x128xbf16, #tpu.memory_space<vmem>>, vector<32x128xbf16>
    %cst_11 = arith.constant dense<0.000000e+00> : vector<8x128xf32>
    %14 = tpu.matmul %12, %13, %cst_11 {dimension_numbers = #tpu.dot_dimension_numbers<[1], [0], [0], [1], [0, 0, 1, 1], [], []>} : vector<8x32xbf16>, vector<32x128xbf16>, vector<8x128xf32> -> vector<8x128xf32>
    %c0_12 = arith.constant 0 : index
    %c0_13 = arith.constant 0 : index
    %15 = vector.load %arg3[%c0_12, %c0_13] : memref<1x128xf32, #tpu.memory_space<vmem>>, vector<1x128xf32>
    %16 = vector.broadcast %15 : vector<1x128xf32> to vector<8x128xf32>
    %17 = arith.addf %14, %16 : vector<8x128xf32>
    %cst_14 = arith.constant 0.000000e+00 : f32
    %18 = vector.broadcast %cst_14 : f32 to vector<8x128xf32>
    %19 = arith.maximumf %17, %18 : vector<8x128xf32>
    %20 = arith.truncf %19 : vector<8x128xf32> to vector<8x128xbf16>
    %c0_15 = arith.constant 0 : index
    %c128 = arith.constant 128 : index
    %21 = vector.load %arg13[%c0_15, %c128] : memref<8x1024xbf16, #tpu.memory_space<vmem>>, vector<8x128xbf16>
    tpu.vector_store %arg13[%c0_15, %c128], %20 {strides = array<i32>} : memref<8x1024xbf16, #tpu.memory_space<vmem>>, vector<8x128xbf16>,
    %c0_16 = arith.constant 0 : index
    %c64 = arith.constant 64 : index
    %22 = vector.load %arg1[%c0_16, %c64] : memref<8x256xf32, #tpu.memory_space<vmem>>, vector<8x32xf32>
    %23 = arith.truncf %22 : vector<8x32xf32> to vector<8x32xbf16>
    %c0_17 = arith.constant 0 : index
    %c0_18 = arith.constant 0 : index
    %24 = vector.load %arg2[%c0_17, %c0_18] : memref<32x128xbf16, #tpu.memory_space<vmem>>, vector<32x128xbf16>
    %cst_19 = arith.constant dense<0.000000e+00> : vector<8x128xf32>
    %25 = tpu.matmul %23, %24, %cst_19 {dimension_numbers = #tpu.dot_dimension_numbers<[1], [0], [0], [1], [0, 0, 1, 1], [], []>} : vector<8x32xbf16>, vector<32x128xbf16>, vector<8x128xf32> -> vector<8x128xf32>
    %c0_20 = arith.constant 0 : index
    %c0_21 = arith.constant 0 : index
    %26 = vector.load %arg3[%c0_20, %c0_21] : memref<1x128xf32, #tpu.memory_space<vmem>>, vector<1x128xf32>
    %27 = vector.broadcast %26 : vector<1x128xf32> to vector<8x128xf32>
    %28 = arith.addf %25, %27 : vector<8x128xf32>
    %cst_22 = arith.constant 0.000000e+00 : f32
    %29 = vector.broadcast %cst_22 : f32 to vector<8x128xf32>
    %30 = arith.maximumf %28, %29 : vector<8x128xf32>
    %31 = arith.truncf %30 : vector<8x128xf32> to vector<8x128xbf16>
    %c0_23 = arith.constant 0 : index
    %c256 = arith.constant 256 : index
    %32 = vector.load %arg13[%c0_23, %c256] : memref<8x1024xbf16, #tpu.memory_space<vmem>>, vector<8x128xbf16>
    tpu.vector_store %arg13[%c0_23, %c256], %31 {strides = array<i32>} : memref<8x1024xbf16, #tpu.memory_space<vmem>>, vector<8x128xbf16>,
    %c0_24 = arith.constant 0 : index
    %c96 = arith.constant 96 : index
    %33 = vector.load %arg1[%c0_24, %c96] : memref<8x256xf32, #tpu.memory_space<vmem>>, vector<8x32xf32>
    %34 = arith.truncf %33 : vector<8x32xf32> to vector<8x32xbf16>
    %c0_25 = arith.constant 0 : index
    %c0_26 = arith.constant 0 : index
    %35 = vector.load %arg2[%c0_25, %c0_26] : memref<32x128xbf16, #tpu.memory_space<vmem>>, vector<32x128xbf16>
    %cst_27 = arith.constant dense<0.000000e+00> : vector<8x128xf32>
    %36 = tpu.matmul %34, %35, %cst_27 {dimension_numbers = #tpu.dot_dimension_numbers<[1], [0], [0], [1], [0, 0, 1, 1], [], []>} : vector<8x32xbf16>, vector<32x128xbf16>, vector<8x128xf32> -> vector<8x128xf32>
    %c0_28 = arith.constant 0 : index
    %c0_29 = arith.constant 0 : index
    %37 = vector.load %arg3[%c0_28, %c0_29] : memref<1x128xf32, #tpu.memory_space<vmem>>, vector<1x128xf32>
    %38 = vector.broadcast %37 : vector<1x128xf32> to vector<8x128xf32>
    %39 = arith.addf %36, %38 : vector<8x128xf32>
    %cst_30 = arith.constant 0.000000e+00 : f32
    %40 = vector.broadcast %cst_30 : f32 to vector<8x128xf32>
    %41 = arith.maximumf %39, %40 : vector<8x128xf32>
    %42 = arith.truncf %41 : vector<8x128xf32> to vector<8x128xbf16>
    %c0_31 = arith.constant 0 : index
    %c384 = arith.constant 384 : index
    %43 = vector.load %arg13[%c0_31, %c384] : memref<8x1024xbf16, #tpu.memory_space<vmem>>, vector<8x128xbf16>
    tpu.vector_store %arg13[%c0_31, %c384], %42 {strides = array<i32>} : memref<8x1024xbf16, #tpu.memory_space<vmem>>, vector<8x128xbf16>,
    %c0_32 = arith.constant 0 : index
    %c128_33 = arith.constant 128 : index
    %44 = vector.load %arg1[%c0_32, %c128_33] : memref<8x256xf32, #tpu.memory_space<vmem>>, vector<8x32xf32>
    %45 = arith.truncf %44 : vector<8x32xf32> to vector<8x32xbf16>
    %c0_34 = arith.constant 0 : index
    %c0_35 = arith.constant 0 : index
    %46 = vector.load %arg2[%c0_34, %c0_35] : memref<32x128xbf16, #tpu.memory_space<vmem>>, vector<32x128xbf16>
    %cst_36 = arith.constant dense<0.000000e+00> : vector<8x128xf32>
    %47 = tpu.matmul %45, %46, %cst_36 {dimension_numbers = #tpu.dot_dimension_numbers<[1], [0], [0], [1], [0, 0, 1, 1], [], []>} : vector<8x32xbf16>, vector<32x128xbf16>, vector<8x128xf32> -> vector<8x128xf32>
    %c0_37 = arith.constant 0 : index
    %c0_38 = arith.constant 0 : index
    %48 = vector.load %arg3[%c0_37, %c0_38] : memref<1x128xf32, #tpu.memory_space<vmem>>, vector<1x128xf32>
    %49 = vector.broadcast %48 : vector<1x128xf32> to vector<8x128xf32>
    %50 = arith.addf %47, %49 : vector<8x128xf32>
    %cst_39 = arith.constant 0.000000e+00 : f32
    %51 = vector.broadcast %cst_39 : f32 to vector<8x128xf32>
    %52 = arith.maximumf %50, %51 : vector<8x128xf32>
    %53 = arith.truncf %52 : vector<8x128xf32> to vector<8x128xbf16>
    %c0_40 = arith.constant 0 : index
    %c512 = arith.constant 512 : index
    %54 = vector.load %arg13[%c0_40, %c512] : memref<8x1024xbf16, #tpu.memory_space<vmem>>, vector<8x128xbf16>
    tpu.vector_store %arg13[%c0_40, %c512], %53 {strides = array<i32>} : memref<8x1024xbf16, #tpu.memory_space<vmem>>, vector<8x128xbf16>,
    %c0_41 = arith.constant 0 : index
    %c160 = arith.constant 160 : index
    %55 = vector.load %arg1[%c0_41, %c160] : memref<8x256xf32, #tpu.memory_space<vmem>>, vector<8x32xf32>
    %56 = arith.truncf %55 : vector<8x32xf32> to vector<8x32xbf16>
    %c0_42 = arith.constant 0 : index
    %c0_43 = arith.constant 0 : index
    %57 = vector.load %arg2[%c0_42, %c0_43] : memref<32x128xbf16, #tpu.memory_space<vmem>>, vector<32x128xbf16>
    %cst_44 = arith.constant dense<0.000000e+00> : vector<8x128xf32>
    %58 = tpu.matmul %56, %57, %cst_44 {dimension_numbers = #tpu.dot_dimension_numbers<[1], [0], [0], [1], [0, 0, 1, 1], [], []>} : vector<8x32xbf16>, vector<32x128xbf16>, vector<8x128xf32> -> vector<8x128xf32>
    %c0_45 = arith.constant 0 : index
    %c0_46 = arith.constant 0 : index
    %59 = vector.load %arg3[%c0_45, %c0_46] : memref<1x128xf32, #tpu.memory_space<vmem>>, vector<1x128xf32>
    %60 = vector.broadcast %59 : vector<1x128xf32> to vector<8x128xf32>
    %61 = arith.addf %58, %60 : vector<8x128xf32>
    %cst_47 = arith.constant 0.000000e+00 : f32
    %62 = vector.broadcast %cst_47 : f32 to vector<8x128xf32>
    %63 = arith.maximumf %61, %62 : vector<8x128xf32>
    %64 = arith.truncf %63 : vector<8x128xf32> to vector<8x128xbf16>
    %c0_48 = arith.constant 0 : index
    %c640 = arith.constant 640 : index
    %65 = vector.load %arg13[%c0_48, %c640] : memref<8x1024xbf16, #tpu.memory_space<vmem>>, vector<8x128xbf16>
    tpu.vector_store %arg13[%c0_48, %c640], %64 {strides = array<i32>} : memref<8x1024xbf16, #tpu.memory_space<vmem>>, vector<8x128xbf16>,
    %c0_49 = arith.constant 0 : index
    %c192 = arith.constant 192 : index
    %66 = vector.load %arg1[%c0_49, %c192] : memref<8x256xf32, #tpu.memory_space<vmem>>, vector<8x32xf32>
    %67 = arith.truncf %66 : vector<8x32xf32> to vector<8x32xbf16>
    %c0_50 = arith.constant 0 : index
    %c0_51 = arith.constant 0 : index
    %68 = vector.load %arg2[%c0_50, %c0_51] : memref<32x128xbf16, #tpu.memory_space<vmem>>, vector<32x128xbf16>
    %cst_52 = arith.constant dense<0.000000e+00> : vector<8x128xf32>
    %69 = tpu.matmul %67, %68, %cst_52 {dimension_numbers = #tpu.dot_dimension_numbers<[1], [0], [0], [1], [0, 0, 1, 1], [], []>} : vector<8x32xbf16>, vector<32x128xbf16>, vector<8x128xf32> -> vector<8x128xf32>
    %c0_53 = arith.constant 0 : index
    %c0_54 = arith.constant 0 : index
    %70 = vector.load %arg3[%c0_53, %c0_54] : memref<1x128xf32, #tpu.memory_space<vmem>>, vector<1x128xf32>
    %71 = vector.broadcast %70 : vector<1x128xf32> to vector<8x128xf32>
    %72 = arith.addf %69, %71 : vector<8x128xf32>
    %cst_55 = arith.constant 0.000000e+00 : f32
    %73 = vector.broadcast %cst_55 : f32 to vector<8x128xf32>
    %74 = arith.maximumf %72, %73 : vector<8x128xf32>
    %75 = arith.truncf %74 : vector<8x128xf32> to vector<8x128xbf16>
    %c0_56 = arith.constant 0 : index
    %c768 = arith.constant 768 : index
    %76 = vector.load %arg13[%c0_56, %c768] : memref<8x1024xbf16, #tpu.memory_space<vmem>>, vector<8x128xbf16>
    tpu.vector_store %arg13[%c0_56, %c768], %75 {strides = array<i32>} : memref<8x1024xbf16, #tpu.memory_space<vmem>>, vector<8x128xbf16>,
    %c0_57 = arith.constant 0 : index
    %c224 = arith.constant 224 : index
    %77 = vector.load %arg1[%c0_57, %c224] : memref<8x256xf32, #tpu.memory_space<vmem>>, vector<8x32xf32>
    %78 = arith.truncf %77 : vector<8x32xf32> to vector<8x32xbf16>
    %c0_58 = arith.constant 0 : index
    %c0_59 = arith.constant 0 : index
    %79 = vector.load %arg2[%c0_58, %c0_59] : memref<32x128xbf16, #tpu.memory_space<vmem>>, vector<32x128xbf16>
    %cst_60 = arith.constant dense<0.000000e+00> : vector<8x128xf32>
    %80 = tpu.matmul %78, %79, %cst_60 {dimension_numbers = #tpu.dot_dimension_numbers<[1], [0], [0], [1], [0, 0, 1, 1], [], []>} : vector<8x32xbf16>, vector<32x128xbf16>, vector<8x128xf32> -> vector<8x128xf32>
    %c0_61 = arith.constant 0 : index
    %c0_62 = arith.constant 0 : index
    %81 = vector.load %arg3[%c0_61, %c0_62] : memref<1x128xf32, #tpu.memory_space<vmem>>, vector<1x128xf32>
    %82 = vector.broadcast %81 : vector<1x128xf32> to vector<8x128xf32>
    %83 = arith.addf %80, %82 : vector<8x128xf32>
    %cst_63 = arith.constant 0.000000e+00 : f32
    %84 = vector.broadcast %cst_63 : f32 to vector<8x128xf32>
    %85 = arith.maximumf %83, %84 : vector<8x128xf32>
    %86 = arith.truncf %85 : vector<8x128xf32> to vector<8x128xbf16>
    %c0_64 = arith.constant 0 : index
    %c896 = arith.constant 896 : index
    %87 = vector.load %arg13[%c0_64, %c896] : memref<8x1024xbf16, #tpu.memory_space<vmem>>, vector<8x128xbf16>
    tpu.vector_store %arg13[%c0_64, %c896], %86 {strides = array<i32>} : memref<8x1024xbf16, #tpu.memory_space<vmem>>, vector<8x128xbf16>,
    %c0_65 = arith.constant 0 : index
    %c0_66 = arith.constant 0 : index
    %88 = vector.load %arg13[%c0_65, %c0_66] : memref<8x1024xbf16, #tpu.memory_space<vmem>>, vector<8x1024xbf16>
    %c0_67 = arith.constant 0 : index
    %c0_68 = arith.constant 0 : index
    %89 = vector.load %arg4[%c0_67, %c0_68] : memref<1024x128xbf16, #tpu.memory_space<vmem>>, vector<1024x128xbf16>
    %cst_69 = arith.constant dense<0.000000e+00> : vector<8x128xf32>
    %90 = tpu.matmul %88, %89, %cst_69 {dimension_numbers = #tpu.dot_dimension_numbers<[1], [0], [0], [1], [0, 0, 1, 1], [], []>} : vector<8x1024xbf16>, vector<1024x128xbf16>, vector<8x128xf32> -> vector<8x128xf32>
    %c0_70 = arith.constant 0 : index
    %c0_71 = arith.constant 0 : index
    %91 = vector.load %arg5[%c0_70, %c0_71] : memref<1x128xf32, #tpu.memory_space<vmem>>, vector<1x128xf32>
    %92 = vector.broadcast %91 : vector<1x128xf32> to vector<8x128xf32>
    %93 = arith.addf %90, %92 : vector<8x128xf32>
    %cst_72 = arith.constant 0.000000e+00 : f32
    %94 = vector.broadcast %cst_72 : f32 to vector<8x128xf32>
    %95 = arith.maximumf %93, %94 : vector<8x128xf32>
    %c0_73 = arith.constant 0 : index
    %c0_74 = arith.constant 0 : index
    %96 = vector.load %arg11[%c0_73, %c0_74] : memref<8x128xf32, #tpu.memory_space<vmem>>, vector<8x128xf32>
    tpu.vector_store %arg11[%c0_73, %c0_74], %95 {strides = array<i32>} : memref<8x128xf32, #tpu.memory_space<vmem>>, vector<8x128xf32>,
    %97 = arith.truncf %95 : vector<8x128xf32> to vector<8x128xbf16>
    %c0_75 = arith.constant 0 : index
    %c0_76 = arith.constant 0 : index
    %98 = vector.load %arg6[%c0_75, %c0_76] : memref<128x1024xbf16, #tpu.memory_space<vmem>>, vector<128x1024xbf16>
    %cst_77 = arith.constant dense<0.000000e+00> : vector<8x1024xf32>
    %99 = tpu.matmul %97, %98, %cst_77 {dimension_numbers = #tpu.dot_dimension_numbers<[1], [0], [0], [1], [0, 0, 1, 1], [], []>} : vector<8x128xbf16>, vector<128x1024xbf16>, vector<8x1024xf32> -> vector<8x1024xf32>
    %c0_78 = arith.constant 0 : index
    %c0_79 = arith.constant 0 : index
    %100 = vector.load %arg7[%c0_78, %c0_79] : memref<1x1024xf32, #tpu.memory_space<vmem>>, vector<1x1024xf32>
    %101 = vector.broadcast %100 : vector<1x1024xf32> to vector<8x1024xf32>
    %102 = arith.addf %99, %101 : vector<8x1024xf32>
    %cst_80 = arith.constant 0.000000e+00 : f32
    %103 = vector.broadcast %cst_80 : f32 to vector<8x1024xf32>
    %104 = arith.maximumf %102, %103 : vector<8x1024xf32>
    %105 = vector.extract_strided_slice %104 {offsets = [0, 0], sizes = [8, 128], strides = [1, 1]} : vector<8x1024xf32> to vector<8x128xf32>
    %106 = arith.truncf %105 : vector<8x128xf32> to vector<8x128xbf16>
    %c0_81 = arith.constant 0 : index
    %c0_82 = arith.constant 0 : index
    %107 = vector.load %arg8[%c0_81, %c0_82] : memref<128x32xbf16, #tpu.memory_space<vmem>>, vector<128x32xbf16>
    %cst_83 = arith.constant dense<0.000000e+00> : vector<8x32xf32>
    %108 = tpu.matmul %106, %107, %cst_83 {dimension_numbers = #tpu.dot_dimension_numbers<[1], [0], [0], [1], [0, 0, 1, 1], [], []>} : vector<8x128xbf16>, vector<128x32xbf16>, vector<8x32xf32> -> vector<8x32xf32>
    %c0_84 = arith.constant 0 : index
    %c0_85 = arith.constant 0 : index
    %109 = vector.load %arg9[%c0_84, %c0_85] : memref<1x32xf32, #tpu.memory_space<vmem>>, vector<1x32xf32>
    %110 = vector.broadcast %109 : vector<1x32xf32> to vector<8x32xf32>
    %111 = arith.addf %108, %110 : vector<8x32xf32>
    %112 = vector.extract_strided_slice %104 {offsets = [0, 128], sizes = [8, 128], strides = [1, 1]} : vector<8x1024xf32> to vector<8x128xf32>
    %113 = arith.truncf %112 : vector<8x128xf32> to vector<8x128xbf16>
    %c0_86 = arith.constant 0 : index
    %c0_87 = arith.constant 0 : index
    %114 = vector.load %arg8[%c0_86, %c0_87] : memref<128x32xbf16, #tpu.memory_space<vmem>>, vector<128x32xbf16>
    %cst_88 = arith.constant dense<0.000000e+00> : vector<8x32xf32>
    %115 = tpu.matmul %113, %114, %cst_88 {dimension_numbers = #tpu.dot_dimension_numbers<[1], [0], [0], [1], [0, 0, 1, 1], [], []>} : vector<8x128xbf16>, vector<128x32xbf16>, vector<8x32xf32> -> vector<8x32xf32>
    %c0_89 = arith.constant 0 : index
    %c0_90 = arith.constant 0 : index
    %116 = vector.load %arg9[%c0_89, %c0_90] : memref<1x32xf32, #tpu.memory_space<vmem>>, vector<1x32xf32>
    %117 = vector.broadcast %116 : vector<1x32xf32> to vector<8x32xf32>
    %118 = arith.addf %115, %117 : vector<8x32xf32>
    %119 = vector.extract_strided_slice %104 {offsets = [0, 256], sizes = [8, 128], strides = [1, 1]} : vector<8x1024xf32> to vector<8x128xf32>
    %120 = arith.truncf %119 : vector<8x128xf32> to vector<8x128xbf16>
    %c0_91 = arith.constant 0 : index
    %c0_92 = arith.constant 0 : index
    %121 = vector.load %arg8[%c0_91, %c0_92] : memref<128x32xbf16, #tpu.memory_space<vmem>>, vector<128x32xbf16>
    %cst_93 = arith.constant dense<0.000000e+00> : vector<8x32xf32>
    %122 = tpu.matmul %120, %121, %cst_93 {dimension_numbers = #tpu.dot_dimension_numbers<[1], [0], [0], [1], [0, 0, 1, 1], [], []>} : vector<8x128xbf16>, vector<128x32xbf16>, vector<8x32xf32> -> vector<8x32xf32>
    %c0_94 = arith.constant 0 : index
    %c0_95 = arith.constant 0 : index
    %123 = vector.load %arg9[%c0_94, %c0_95] : memref<1x32xf32, #tpu.memory_space<vmem>>, vector<1x32xf32>
    %124 = vector.broadcast %123 : vector<1x32xf32> to vector<8x32xf32>
    %125 = arith.addf %122, %124 : vector<8x32xf32>
    %126 = vector.extract_strided_slice %104 {offsets = [0, 384], sizes = [8, 128], strides = [1, 1]} : vector<8x1024xf32> to vector<8x128xf32>
    %127 = arith.truncf %126 : vector<8x128xf32> to vector<8x128xbf16>
    %c0_96 = arith.constant 0 : index
    %c0_97 = arith.constant 0 : index
    %128 = vector.load %arg8[%c0_96, %c0_97] : memref<128x32xbf16, #tpu.memory_space<vmem>>, vector<128x32xbf16>
    %cst_98 = arith.constant dense<0.000000e+00> : vector<8x32xf32>
    %129 = tpu.matmul %127, %128, %cst_98 {dimension_numbers = #tpu.dot_dimension_numbers<[1], [0], [0], [1], [0, 0, 1, 1], [], []>} : vector<8x128xbf16>, vector<128x32xbf16>, vector<8x32xf32> -> vector<8x32xf32>
    %c0_99 = arith.constant 0 : index
    %c0_100 = arith.constant 0 : index
    %130 = vector.load %arg9[%c0_99, %c0_100] : memref<1x32xf32, #tpu.memory_space<vmem>>, vector<1x32xf32>
    %131 = vector.broadcast %130 : vector<1x32xf32> to vector<8x32xf32>
    %132 = arith.addf %129, %131 : vector<8x32xf32>
    %133 = vector.extract_strided_slice %104 {offsets = [0, 512], sizes = [8, 128], strides = [1, 1]} : vector<8x1024xf32> to vector<8x128xf32>
    %134 = arith.truncf %133 : vector<8x128xf32> to vector<8x128xbf16>
    %c0_101 = arith.constant 0 : index
    %c0_102 = arith.constant 0 : index
    %135 = vector.load %arg8[%c0_101, %c0_102] : memref<128x32xbf16, #tpu.memory_space<vmem>>, vector<128x32xbf16>
    %cst_103 = arith.constant dense<0.000000e+00> : vector<8x32xf32>
    %136 = tpu.matmul %134, %135, %cst_103 {dimension_numbers = #tpu.dot_dimension_numbers<[1], [0], [0], [1], [0, 0, 1, 1], [], []>} : vector<8x128xbf16>, vector<128x32xbf16>, vector<8x32xf32> -> vector<8x32xf32>
    %c0_104 = arith.constant 0 : index
    %c0_105 = arith.constant 0 : index
    %137 = vector.load %arg9[%c0_104, %c0_105] : memref<1x32xf32, #tpu.memory_space<vmem>>, vector<1x32xf32>
    %138 = vector.broadcast %137 : vector<1x32xf32> to vector<8x32xf32>
    %139 = arith.addf %136, %138 : vector<8x32xf32>
    %140 = vector.extract_strided_slice %104 {offsets = [0, 640], sizes = [8, 128], strides = [1, 1]} : vector<8x1024xf32> to vector<8x128xf32>
    %141 = arith.truncf %140 : vector<8x128xf32> to vector<8x128xbf16>
    %c0_106 = arith.constant 0 : index
    %c0_107 = arith.constant 0 : index
    %142 = vector.load %arg8[%c0_106, %c0_107] : memref<128x32xbf16, #tpu.memory_space<vmem>>, vector<128x32xbf16>
    %cst_108 = arith.constant dense<0.000000e+00> : vector<8x32xf32>
    %143 = tpu.matmul %141, %142, %cst_108 {dimension_numbers = #tpu.dot_dimension_numbers<[1], [0], [0], [1], [0, 0, 1, 1], [], []>} : vector<8x128xbf16>, vector<128x32xbf16>, vector<8x32xf32> -> vector<8x32xf32>
    %c0_109 = arith.constant 0 : index
    %c0_110 = arith.constant 0 : index
    %144 = vector.load %arg9[%c0_109, %c0_110] : memref<1x32xf32, #tpu.memory_space<vmem>>, vector<1x32xf32>
    %145 = vector.broadcast %144 : vector<1x32xf32> to vector<8x32xf32>
    %146 = arith.addf %143, %145 : vector<8x32xf32>
    %147 = vector.extract_strided_slice %104 {offsets = [0, 768], sizes = [8, 128], strides = [1, 1]} : vector<8x1024xf32> to vector<8x128xf32>
    %148 = arith.truncf %147 : vector<8x128xf32> to vector<8x128xbf16>
    %c0_111 = arith.constant 0 : index
    %c0_112 = arith.constant 0 : index
    %149 = vector.load %arg8[%c0_111, %c0_112] : memref<128x32xbf16, #tpu.memory_space<vmem>>, vector<128x32xbf16>
    %cst_113 = arith.constant dense<0.000000e+00> : vector<8x32xf32>
    %150 = tpu.matmul %148, %149, %cst_113 {dimension_numbers = #tpu.dot_dimension_numbers<[1], [0], [0], [1], [0, 0, 1, 1], [], []>} : vector<8x128xbf16>, vector<128x32xbf16>, vector<8x32xf32> -> vector<8x32xf32>
    %c0_114 = arith.constant 0 : index
    %c0_115 = arith.constant 0 : index
    %151 = vector.load %arg9[%c0_114, %c0_115] : memref<1x32xf32, #tpu.memory_space<vmem>>, vector<1x32xf32>
    %152 = vector.broadcast %151 : vector<1x32xf32> to vector<8x32xf32>
    %153 = arith.addf %150, %152 : vector<8x32xf32>
    %154 = vector.extract_strided_slice %104 {offsets = [0, 896], sizes = [8, 128], strides = [1, 1]} : vector<8x1024xf32> to vector<8x128xf32>
    %155 = arith.truncf %154 : vector<8x128xf32> to vector<8x128xbf16>
    %c0_116 = arith.constant 0 : index
    %c0_117 = arith.constant 0 : index
    %156 = vector.load %arg8[%c0_116, %c0_117] : memref<128x32xbf16, #tpu.memory_space<vmem>>, vector<128x32xbf16>
    %cst_118 = arith.constant dense<0.000000e+00> : vector<8x32xf32>
    %157 = tpu.matmul %155, %156, %cst_118 {dimension_numbers = #tpu.dot_dimension_numbers<[1], [0], [0], [1], [0, 0, 1, 1], [], []>} : vector<8x128xbf16>, vector<128x32xbf16>, vector<8x32xf32> -> vector<8x32xf32>
    %c0_119 = arith.constant 0 : index
    %c0_120 = arith.constant 0 : index
    %158 = vector.load %arg9[%c0_119, %c0_120] : memref<1x32xf32, #tpu.memory_space<vmem>>, vector<1x32xf32>
    %159 = vector.broadcast %158 : vector<1x32xf32> to vector<8x32xf32>
    %160 = arith.addf %157, %159 : vector<8x32xf32>
    %161 = tpu.concatenate %111, %118, %125, %132, %139, %146, %153, %160 in 1 : vector<8x32xf32>, vector<8x32xf32>, vector<8x32xf32>, vector<8x32xf32>, vector<8x32xf32>, vector<8x32xf32>, vector<8x32xf32>, vector<8x32xf32> -> vector<8x256xf32>
    %c0_121 = arith.constant 0 : index
    %c0_122 = arith.constant 0 : index
    %162 = vector.load %arg10[%c0_121, %c0_122] : memref<8x256xf32, #tpu.memory_space<vmem>>, vector<8x256xf32>
    tpu.vector_store %arg10[%c0_121, %c0_122], %161 {strides = array<i32>} : memref<8x256xf32, #tpu.memory_space<vmem>>, vector<8x256xf32>,
    %c8_i32 = arith.constant 8 : i32
    %163 = arith.muli %arg0, %c8_i32 : i32
    %164 = tpu.iota {dimensions = array<i32: 0>} : vector<8x1xi32>
    %165 = vector.broadcast %163 : i32 to vector<8x1xi32>
    %166 = arith.addi %164, %165 : vector<8x1xi32>
    %c2_i32 = arith.constant 2 : i32
    %167 = vector.broadcast %c2_i32 : i32 to vector<8x1xi32>
    %168 = arith.cmpi slt, %166, %167 : vector<8x1xi32>
    %169 = arith.extui %168 : vector<8x1xi1> to vector<8x1xi32>
    %170 = arith.sitofp %169 : vector<8x1xi32> to vector<8x1xf32>
    %c0_123 = arith.constant 0 : index
    %c0_124 = arith.constant 0 : index
    %171 = vector.load %arg1[%c0_123, %c0_124] : memref<8x256xf32, #tpu.memory_space<vmem>>, vector<8x256xf32>
    %172 = arith.subf %161, %171 : vector<8x256xf32>
    %173 = vector.broadcast %170 : vector<8x1xf32> to vector<8x256xf32>
    %174 = arith.mulf %172, %173 : vector<8x256xf32>
    %175 = arith.mulf %174, %174 : vector<8x256xf32>
    %176 = vector.shape_cast %175 : vector<8x256xf32> to vector<1x8x256xf32>
    %cst_125 = arith.constant dense<0.000000e+00> : vector<1xf32>
    %177 = vector.multi_reduction <add>, %176, %cst_125 [1, 2] : vector<1x8x256xf32> to vector<1xf32>
    %178 = vector.shape_cast %177 : vector<1xf32> to vector<1x1x1xf32>
    %179 = vector.extract %178[0, 0, 0] : f32 from vector<1x1x1xf32>
    %180 = vector.broadcast %179 : f32 to vector<1x1x128xf32>
    %c0_126 = arith.constant 0 : index
    %c0_127 = arith.constant 0 : index
    %c0_128 = arith.constant 0 : index
    %181 = vector.load %arg12[%c0_126, %c0_127, %c0_128] : memref<1x1x128xf32, #tpu.memory_space<vmem>>, vector<1x1x128xf32>
    tpu.vector_store %arg12[%c0_126, %c0_127, %c0_128], %180 {strides = array<i32>} : memref<1x1x128xf32, #tpu.memory_space<vmem>>, vector<1x1x128xf32>,
    return
  }
  func.func @transform_0(%arg0: i32) -> (i32, i32) {
    %c0_i32 = arith.constant 0 : i32
    %c0_i32_0 = arith.constant 0 : i32
    return %arg0, %c0_i32 : i32, i32
  }
  func.func @transform_1(%arg0: i32) -> (i32, i32) {
    %c0_i32 = arith.constant 0 : i32
    %c0_i32_0 = arith.constant 0 : i32
    %c0_i32_1 = arith.constant 0 : i32
    return %c0_i32, %c0_i32_0 : i32, i32
  }
  func.func @transform_2(%arg0: i32) -> (i32, i32) {
    %c0_i32 = arith.constant 0 : i32
    %c0_i32_0 = arith.constant 0 : i32
    %c0_i32_1 = arith.constant 0 : i32
    return %c0_i32, %c0_i32_0 : i32, i32
  }
  func.func @transform_3(%arg0: i32) -> (i32, i32) {
    %c0_i32 = arith.constant 0 : i32
    %c0_i32_0 = arith.constant 0 : i32
    %c0_i32_1 = arith.constant 0 : i32
    return %c0_i32, %c0_i32_0 : i32, i32
  }
  func.func @transform_4(%arg0: i32) -> (i32, i32) {
    %c0_i32 = arith.constant 0 : i32
    %c0_i32_0 = arith.constant 0 : i32
    %c0_i32_1 = arith.constant 0 : i32
    return %c0_i32, %c0_i32_0 : i32, i32
  }
  func.func @transform_5(%arg0: i32) -> (i32, i32) {
    %c0_i32 = arith.constant 0 : i32
    %c0_i32_0 = arith.constant 0 : i32
    %c0_i32_1 = arith.constant 0 : i32
    return %c0_i32, %c0_i32_0 : i32, i32
  }
  func.func @transform_6(%arg0: i32) -> (i32, i32) {
    %c0_i32 = arith.constant 0 : i32
    %c0_i32_0 = arith.constant 0 : i32
    %c0_i32_1 = arith.constant 0 : i32
    return %c0_i32, %c0_i32_0 : i32, i32
  }
  func.func @transform_7(%arg0: i32) -> (i32, i32) {
    %c0_i32 = arith.constant 0 : i32
    %c0_i32_0 = arith.constant 0 : i32
    %c0_i32_1 = arith.constant 0 : i32
    return %c0_i32, %c0_i32_0 : i32, i32
  }
  func.func @transform_8(%arg0: i32) -> (i32, i32) {
    %c0_i32 = arith.constant 0 : i32
    %c0_i32_0 = arith.constant 0 : i32
    %c0_i32_1 = arith.constant 0 : i32
    return %c0_i32, %c0_i32_0 : i32, i32
  }
  func.func @transform_9(%arg0: i32) -> (i32, i32) {
    %c0_i32 = arith.constant 0 : i32
    %c0_i32_0 = arith.constant 0 : i32
    return %arg0, %c0_i32 : i32, i32
  }
  func.func @transform_10(%arg0: i32) -> (i32, i32) {
    %c0_i32 = arith.constant 0 : i32
    %c0_i32_0 = arith.constant 0 : i32
    return %arg0, %c0_i32 : i32, i32
  }
  func.func @transform_11(%arg0: i32) -> (i32, i32, i32) {
    %c0_i32 = arith.constant 0 : i32
    %c0_i32_0 = arith.constant 0 : i32
    %c0_i32_1 = arith.constant 0 : i32
    return %arg0, %c0_i32, %c0_i32_0 : i32, i32, i32
  }
}

</mosaic_0001>

<llo_original>
// kernel: tpu_custom_call.1
$region0: #{tpu_custom_call.1}
  #allocation0 [shape = 'u32[]', space=smem, size = 0x4, offset = 0x4, fixed_abs, tag = 'smem constant byte address 0x4 - core index']
  #allocation1 [shape = 'u32[144,128]{1,0:T(1,128)}', space=vmem, size = 0x12000, scoped, tag = 'internal scratch']
  #allocation2 [shape = 'bf16[8,1024]{1,0:T(8,128)(2,1)}', space=vmem, size = 0x4000, scoped, tag = 'scratch operand']
  %s0 = inlined_call_operand.vmem [shape: f32[8,256], index: 0, kind: input, shape index: {}]
  %s1 = inlined_call_operand.vmem [shape: bf16[32,128], index: 1, kind: input, shape index: {}]
  %s2 = inlined_call_operand.vmem [shape: f32[1,128], index: 2, kind: input, shape index: {}]
  %s3 = inlined_call_operand.hbm [shape: bf16[1024,128], index: 3, kind: input, shape index: {}]
  %s4 = inlined_call_operand.vmem [shape: f32[1,128], index: 4, kind: input, shape index: {}]
  %s5 = inlined_call_operand.hbm [shape: bf16[128,1024], index: 5, kind: input, shape index: {}]
  %s6 = inlined_call_operand.vmem [shape: f32[1,1024], index: 6, kind: input, shape index: {}]
  %s7 = inlined_call_operand.vmem [shape: bf16[128,32], index: 7, kind: input, shape index: {}]
  %s8 = inlined_call_operand.vmem [shape: f32[1,32], index: 8, kind: input, shape index: {}]
  %s9 = inlined_call_operand.hbm [shape: f32[8,256], index: 9, kind: output, shape index: {0}]
  %s10 = inlined_call_operand.hbm [shape: f32[8,128], index: 10, kind: output, shape index: {1}]
  %s11 = inlined_call_operand.hbm [shape: f32[1,1,128], index: 11, kind: output, shape index: {2}]
  %12 = xla_tuple %s9, %s10, %s11
  %s13 = sld [smem:[#allocation0]]
  $region70: #{tpu_custom_call.1} parent=0
    _
  %s15 = ssub.s32 1, %s13
  %s16 = scalar_select 0, %s15, %s13
  $region1: #{tpu_custom_call.1} parent=0
    #allocation3 [shape = 'u8[262144]{0}', space=vmem, size = 0x40000, scoped, tag = 'input window, operand 3, single buffered']
    #allocation4 [shape = 's32[1]{0}', space=sflag, size = 0x4, scoped, tag = 'scoped memory for tpu_custom_call.1']
    #allocation5 [shape = 's32[1]{0}', space=sflag, size = 0x4, scoped, tag = 'scoped memory for tpu_custom_call.1']
    #allocation6 [shape = 'u8[262144]{0}', space=vmem, size = 0x40000, scoped, tag = 'input window, operand 5, single buffered']
    #allocation7 [shape = 's32[1]{0}', space=sflag, size = 0x4, scoped, tag = 'scoped memory for tpu_custom_call.1']
    #allocation8 [shape = 'u8[8192]{0}', space=vmem, size = 0x2000, scoped, tag = 'output window, operand 0, single buffered']
    #allocation9 [shape = 'u8[4096]{0}', space=vmem, size = 0x1000, scoped, tag = 'output window, operand 1, single buffered']
    #allocation10 [shape = 's32[1]{0}', space=sflag, size = 0x4, scoped, tag = 'scoped memory for tpu_custom_call.1']
    #allocation11 [shape = 'u8[512]{0}', space=vmem, size = 0x400, scoped, tag = 'output window, operand 2, single buffered']
    %17 = vsyncpa [#allocation4], 0
    %18 = vsyncpa [#allocation7], 0
    %19 = vsyncpa [#allocation5], 0
    %20 = vsyncpa [#allocation10], 0
    // Predicated region
    $region2: #{tpu_custom_call.1} parent=1 // pred_check
      _
    $region3: #{tpu_custom_call.1} parent=1 // pred_check_branch
      %22 = sbr.rel (0) target = $region5
    $region4: #{tpu_custom_call.1} parent=1 // pred_region
      _
    $region5: #{tpu_custom_call.1} parent=1 // pred_fallthru
      _
    // Predicated region
    $region6: #{tpu_custom_call.1} parent=1 // pred_check
      _
    $region7: #{tpu_custom_call.1} parent=1 // pred_check_branch
      %24 = sbr.rel (0) target = $region9
    $region8: #{tpu_custom_call.1} parent=1 // pred_region
      _
    $region9: #{tpu_custom_call.1} parent=1 // pred_fallthru
      _
    // Predicated region
    $region10: #{tpu_custom_call.1} parent=1 // pred_check
      _
    $region11: #{tpu_custom_call.1} parent=1 // pred_check_branch
      %26 = sbr.rel (0) target = $region13
    $region12: #{tpu_custom_call.1} parent=1 // pred_region
      _
    $region13: #{tpu_custom_call.1} parent=1 // pred_fallthru
      _
    // Predicated region
    $region14: #{tpu_custom_call.1} parent=1 // pred_check
      _
    $region15: #{tpu_custom_call.1} parent=1 // pred_check_branch
      %28 = sbr.rel (0) target = $region17
    $region16: #{tpu_custom_call.1} parent=1 // pred_region
      %s30 = ssub.s32 8192, 8192
      %31 = vsyncadd [#allocation4], %s30
      %s32 = sshll.u32 [#allocation3], 4
      %s33 = int_to_ptr.vmem [resolvable:$true] %s32
      %38 = dma.hbm_to_vmem [thread:$0]  %s3, 8192, %s33, [#allocation4], 64, 64, 4
    $region17: #{tpu_custom_call.1} parent=1 // pred_fallthru
      _
    // Predicated region
    $region18: #{tpu_custom_call.1} parent=1 // pred_check
      _
    $region19: #{tpu_custom_call.1} parent=1 // pred_check_branch
      %40 = sbr.rel (0) target = $region21
    $region20: #{tpu_custom_call.1} parent=1 // pred_region
      _
    $region21: #{tpu_custom_call.1} parent=1 // pred_fallthru
      _
    // Predicated region
    $region22: #{tpu_custom_call.1} parent=1 // pred_check
      _
    $region23: #{tpu_custom_call.1} parent=1 // pred_check_branch
      %42 = sbr.rel (0) target = $region25
    $region24: #{tpu_custom_call.1} parent=1 // pred_region
      %s44 = ssub.s32 8192, 8192
      %45 = vsyncadd [#allocation7], %s44
      %s46 = sshll.u32 [#allocation6], 4
      %s47 = int_to_ptr.vmem [resolvable:$true] %s46
      %52 = dma.hbm_to_vmem [thread:$0]  %s5, 8192, %s47, [#allocation7], 512, 512, 32
    $region25: #{tpu_custom_call.1} parent=1 // pred_fallthru
      _
    // Predicated region
    $region26: #{tpu_custom_call.1} parent=1 // pred_check
      _
    $region27: #{tpu_custom_call.1} parent=1 // pred_check_branch
      %54 = sbr.rel (0) target = $region29
    $region28: #{tpu_custom_call.1} parent=1 // pred_region
      _
    $region29: #{tpu_custom_call.1} parent=1 // pred_fallthru
      _
    // Predicated region
    $region30: #{tpu_custom_call.1} parent=1 // pred_check
      _
    $region31: #{tpu_custom_call.1} parent=1 // pred_check_branch
      %56 = sbr.rel (0) target = $region33
    $region32: #{tpu_custom_call.1} parent=1 // pred_region
      _
    $region33: #{tpu_custom_call.1} parent=1 // pred_fallthru
      _
    // Predicated region
    $region34: #{tpu_custom_call.1} parent=1 // pred_check
      _
    $region35: #{tpu_custom_call.1} parent=1 // pred_check_branch
      %58 = sbr.rel (0) target = $region37
    $region36: #{tpu_custom_call.1} parent=1 // pred_region
      _
    $region37: #{tpu_custom_call.1} parent=1 // pred_fallthru
      _
    // Predicated region
    $region38: #{tpu_custom_call.1} parent=1 // pred_check
      _
    $region39: #{tpu_custom_call.1} parent=1 // pred_check_branch
      %60 = sbr.rel (0) target = $region41
    $region40: #{tpu_custom_call.1} parent=1 // pred_region
      %61 = dma.done [#allocation4], 8192
    $region41: #{tpu_custom_call.1} parent=1 // pred_fallthru
      _
    // Predicated region
    $region42: #{tpu_custom_call.1} parent=1 // pred_check
      _
    $region43: #{tpu_custom_call.1} parent=1 // pred_check_branch
      %63 = sbr.rel (0) target = $region45
    $region44: #{tpu_custom_call.1} parent=1 // pred_region
      %64 = dma.done [#allocation7], 8192
    $region45: #{tpu_custom_call.1} parent=1 // pred_fallthru
      _
    %v66 = vld [vmem:[%s0] sm:$0xff]
    %v67 = vpack.c.bf16 %v66, %v66
    %v68 = vld [vmem:[%s1] sm:$0xf]
    %v69 = vld [vmem:[%s1 + $0x4] sm:$0xf]
    %v70 = vld [vmem:[%s1 + $0x8] sm:$0xf]
    %v71 = vld [vmem:[%s1 + $0xc] sm:$0xf]
    %v72 = vld [vmem:[%s2] sm:$0x1]
    %v74 = vlaneseq
    %v75 = vshrl.u32 %v74, 7
    %v76 = vsub.s32 0, %v75
    %v77 = vrot.slane %v72, %v76
    %v83 = vunpack.c.l.b16 %v68
    %v84 = vunpack.c.l.b16 %v69
    %v85 = vunpack.c.l.b16 %v70
    %v86 = vunpack.c.l.b16 %v71
    %v87 = vpack.c.b16 %v84, %v83
    %v88 = vpack.c.b16 %v86, %v85
    %vm91 = vcmask 261120
    %v93 = vsel %vm91, %v67, 0
    %95 = vmatprep.subr.bf16.mxu0 0
    %96 = vmatpush1.bf16.msra.mxu0 %v87
    %97 = vmatprep.subr.bf16.mxu0 0
    %98 = vmatpush1.bf16.msra.mxu0 %v88
    %99 = vmatprep.subr.bf16.mxu0 0
    %100 = vmatpush1.bf16.msra.mxu0 0
    %101 = vmatprep.subr.bf16.mxu0 0
    %102 = vmatpush1.bf16.msra.mxu0 0
    %103 = vmatprep.subr.bf16.mxu0 0
    %104 = vmatpush1.bf16.msra.mxu0 0
    %105 = vmatprep.subr.bf16.mxu0 0
    %106 = vmatpush1.bf16.msra.mxu0 0
    %107 = vmatprep.subr.bf16.mxu0 0
    %108 = vmatpush1.bf16.msra.mxu0 0
    %109 = vmatprep.subr.bf16.mxu0 0
    %110 = vmatpush1.bf16.msra.mxu0 0
    %111 = vmatprep.subr.bf16.mxu0 0
    %112 = vmatpush1.bf16.msra.mxu0 0
    %113 = vmatprep.subr.bf16.mxu0 0
    %114 = vmatpush1.bf16.msra.mxu0 0
    %115 = vmatprep.subr.bf16.mxu0 0
    %116 = vmatpush1.bf16.msra.mxu0 0
    %117 = vmatprep.subr.bf16.mxu0 0
    %118 = vmatpush1.bf16.msra.mxu0 0
    %119 = vmatprep.subr.bf16.mxu0 0
    %120 = vmatpush1.bf16.msra.mxu0 0
    %121 = vmatprep.subr.bf16.mxu0 0
    %122 = vmatpush1.bf16.msra.mxu0 0
    %123 = vmatprep.subr.bf16.mxu0 0
    %124 = vmatpush1.bf16.msra.mxu0 0
    %125 = vmatprep.subr.bf16.mxu0 0
    %126 = vmatpush1.bf16.msra.mxu0 0
    %127 = vmatprep.mubr.bf16.mxu0 0
    %128 = vmatmul.mubr.bf16.gmra.mrb[0].mxu0 %v93
    %v129 = vpop.f32.mrb[0].mxu0
    %v130 = vadd.f32 %v77, %v129
    %v131 = vpop.f32.mrb[0].mxu0
    %v132 = vpop.f32.mrb[0].mxu0
    %v133 = vpop.f32.mrb[0].mxu0
    %134 = vdwg.mxu0
    %v135 = vmax.f32 %v130, 0.0
    %v136 = vpack.c.bf16 %v135, %v135
    %137 = vst [vmem:[#allocation2] sm:$0xf] %v136
    %v138 = vld [vmem:[%s0] sm:$0xff]
    %v139 = vpack.c.bf16 %v138, %v138
    %v140 = vld [vmem:[%s1] sm:$0xf]
    %v141 = vld [vmem:[%s1 + $0x4] sm:$0xf]
    %v142 = vld [vmem:[%s1 + $0x8] sm:$0xf]
    %v143 = vld [vmem:[%s1 + $0xc] sm:$0xf]
    %v144 = vld [vmem:[%s2] sm:$0x1]
    %v146 = vlaneseq
    %v147 = vshrl.u32 %v146, 7
    %v148 = vsub.s32 0, %v147
    %v149 = vrot.slane %v144, %v148
    %152 = vrot.lane.b32.xlu0 %v139, 96
    %v153 = vpop.permute.xlu0 %152
    %v158 = vunpack.c.l.b16 %v140
    %v159 = vunpack.c.l.b16 %v141
    %v160 = vunpack.c.l.b16 %v142
    %v161 = vunpack.c.l.b16 %v143
    %v162 = vpack.c.b16 %v159, %v158
    %v163 = vpack.c.b16 %v161, %v160
    %v167 = vsel %vm91, %v153, 0
    %169 = vmatprep.subr.bf16.mxu0 0
    %170 = vmatpush1.bf16.msra.mxu0 %v162
    %171 = vmatprep.subr.bf16.mxu0 0
    %172 = vmatpush1.bf16.msra.mxu0 %v163
    %173 = vmatprep.subr.bf16.mxu0 0
    %174 = vmatpush1.bf16.msra.mxu0 0
    %175 = vmatprep.subr.bf16.mxu0 0
    %176 = vmatpush1.bf16.msra.mxu0 0
    %177 = vmatprep.subr.bf16.mxu0 0
    %178 = vmatpush1.bf16.msra.mxu0 0
    %179 = vmatprep.subr.bf16.mxu0 0
    %180 = vmatpush1.bf16.msra.mxu0 0
    %181 = vmatprep.subr.bf16.mxu0 0
    %182 = vmatpush1.bf16.msra.mxu0 0
    %183 = vmatprep.subr.bf16.mxu0 0
    %184 = vmatpush1.bf16.msra.mxu0 0
    %185 = vmatprep.subr.bf16.mxu0 0
    %186 = vmatpush1.bf16.msra.mxu0 0
    %187 = vmatprep.subr.bf16.mxu0 0
    %188 = vmatpush1.bf16.msra.mxu0 0
    %189 = vmatprep.subr.bf16.mxu0 0
    %190 = vmatpush1.bf16.msra.mxu0 0
    %191 = vmatprep.subr.bf16.mxu0 0
    %192 = vmatpush1.bf16.msra.mxu0 0
    %193 = vmatprep.subr.bf16.mxu0 0
    %194 = vmatpush1.bf16.msra.mxu0 0
    %195 = vmatprep.subr.bf16.mxu0 0
    %196 = vmatpush1.bf16.msra.mxu0 0
    %197 = vmatprep.subr.bf16.mxu0 0
    %198 = vmatpush1.bf16.msra.mxu0 0
    %199 = vmatprep.subr.bf16.mxu0 0
    %200 = vmatpush1.bf16.msra.mxu0 0
    %201 = vmatprep.mubr.bf16.mxu0 0
    %202 = vmatmul.mubr.bf16.gmra.mrb[0].mxu0 %v167
    %v203 = vpop.f32.mrb[0].mxu0
    %v204 = vadd.f32 %v149, %v203
    %v205 = vpop.f32.mrb[0].mxu0
    %v206 = vpop.f32.mrb[0].mxu0
    %v207 = vpop.f32.mrb[0].mxu0
    %208 = vdwg.mxu0
    %v209 = vmax.f32 %v204, 0.0
    %v210 = vpack.c.bf16 %v209, %v209
    %211 = vst [vmem:[#allocation2 + $0x4] sm:$0xf] %v210
    %v212 = vld [vmem:[%s0] sm:$0xff]
    %v213 = vpack.c.bf16 %v212, %v212
    %v214 = vld [vmem:[%s1] sm:$0xf]
    %v215 = vld [vmem:[%s1 + $0x4] sm:$0xf]
    %v216 = vld [vmem:[%s1 + $0x8] sm:$0xf]
    %v217 = vld [vmem:[%s1 + $0xc] sm:$0xf]
    %v218 = vld [vmem:[%s2] sm:$0x1]
    %v220 = vlaneseq
    %v221 = vshrl.u32 %v220, 7
    %v222 = vsub.s32 0, %v221
    %v223 = vrot.slane %v218, %v222
    %226 = vrot.lane.b32.xlu0 %v213, 64
    %v227 = vpop.permute.xlu0 %226
    %v232 = vunpack.c.l.b16 %v214
    %v233 = vunpack.c.l.b16 %v215
    %v234 = vunpack.c.l.b16 %v216
    %v235 = vunpack.c.l.b16 %v217
    %v236 = vpack.c.b16 %v233, %v232
    %v237 = vpack.c.b16 %v235, %v234
    %v241 = vsel %vm91, %v227, 0
    %243 = vmatprep.subr.bf16.mxu0 0
    %244 = vmatpush1.bf16.msra.mxu0 %v236
    %245 = vmatprep.subr.bf16.mxu0 0
    %246 = vmatpush1.bf16.msra.mxu0 %v237
    %247 = vmatprep.subr.bf16.mxu0 0
    %248 = vmatpush1.bf16.msra.mxu0 0
    %249 = vmatprep.subr.bf16.mxu0 0
    %250 = vmatpush1.bf16.msra.mxu0 0
    %251 = vmatprep.subr.bf16.mxu0 0
    %252 = vmatpush1.bf16.msra.mxu0 0
    %253 = vmatprep.subr.bf16.mxu0 0
    %254 = vmatpush1.bf16.msra.mxu0 0
    %255 = vmatprep.subr.bf16.mxu0 0
    %256 = vmatpush1.bf16.msra.mxu0 0
    %257 = vmatprep.subr.bf16.mxu0 0
    %258 = vmatpush1.bf16.msra.mxu0 0
    %259 = vmatprep.subr.bf16.mxu0 0
    %260 = vmatpush1.bf16.msra.mxu0 0
    %261 = vmatprep.subr.bf16.mxu0 0
    %262 = vmatpush1.bf16.msra.mxu0 0
    %263 = vmatprep.subr.bf16.mxu0 0
    %264 = vmatpush1.bf16.msra.mxu0 0
    %265 = vmatprep.subr.bf16.mxu0 0
    %266 = vmatpush1.bf16.msra.mxu0 0
    %267 = vmatprep.subr.bf16.mxu0 0
    %268 = vmatpush1.bf16.msra.mxu0 0
    %269 = vmatprep.subr.bf16.mxu0 0
    %270 = vmatpush1.bf16.msra.mxu0 0
    %271 = vmatprep.subr.bf16.mxu0 0
    %272 = vmatpush1.bf16.msra.mxu0 0
    %273 = vmatprep.subr.bf16.mxu0 0
    %274 = vmatpush1.bf16.msra.mxu0 0
    %275 = vmatprep.mubr.bf16.mxu0 0
    %276 = vmatmul.mubr.bf16.gmra.mrb[0].mxu0 %v241
    %v277 = vpop.f32.mrb[0].mxu0
    %v278 = vadd.f32 %v223, %v277
    %v279 = vpop.f32.mrb[0].mxu0
    %v280 = vpop.f32.mrb[0].mxu0
    %v281 = vpop.f32.mrb[0].mxu0
    %282 = vdwg.mxu0
    %v283 = vmax.f32 %v278, 0.0
    %v284 = vpack.c.bf16 %v283, %v283
    %285 = vst [vmem:[#allocation2 + $0x8] sm:$0xf] %v284
    %v286 = vld [vmem:[%s0] sm:$0xff]
    %v287 = vpack.c.bf16 %v286, %v286
    %v288 = vld [vmem:[%s1] sm:$0xf]
    %v289 = vld [vmem:[%s1 + $0x4] sm:$0xf]
    %v290 = vld [vmem:[%s1 + $0x8] sm:$0xf]
    %v291 = vld [vmem:[%s1 + $0xc] sm:$0xf]
    %v292 = vld [vmem:[%s2] sm:$0x1]
    %v294 = vlaneseq
    %v295 = vshrl.u32 %v294, 7
    %v296 = vsub.s32 0, %v295
    %v297 = vrot.slane %v292, %v296
    %300 = vrot.lane.b32.xlu0 %v287, 32
    %v301 = vpop.permute.xlu0 %300
    %v306 = vunpack.c.l.b16 %v288
    %v307 = vunpack.c.l.b16 %v289
    %v308 = vunpack.c.l.b16 %v290
    %v309 = vunpack.c.l.b16 %v291
    %v310 = vpack.c.b16 %v307, %v306
    %v311 = vpack.c.b16 %v309, %v308
    %v315 = vsel %vm91, %v301, 0
    %317 = vmatprep.subr.bf16.mxu0 0
    %318 = vmatpush1.bf16.msra.mxu0 %v310
    %319 = vmatprep.subr.bf16.mxu0 0
    %320 = vmatpush1.bf16.msra.mxu0 %v311
    %321 = vmatprep.subr.bf16.mxu0 0
    %322 = vmatpush1.bf16.msra.mxu0 0
    %323 = vmatprep.subr.bf16.mxu0 0
    %324 = vmatpush1.bf16.msra.mxu0 0
    %325 = vmatprep.subr.bf16.mxu0 0
    %326 = vmatpush1.bf16.msra.mxu0 0
    %327 = vmatprep.subr.bf16.mxu0 0
    %328 = vmatpush1.bf16.msra.mxu0 0
    %329 = vmatprep.subr.bf16.mxu0 0
    %330 = vmatpush1.bf16.msra.mxu0 0
    %331 = vmatprep.subr.bf16.mxu0 0
    %332 = vmatpush1.bf16.msra.mxu0 0
    %333 = vmatprep.subr.bf16.mxu0 0
    %334 = vmatpush1.bf16.msra.mxu0 0
    %335 = vmatprep.subr.bf16.mxu0 0
    %336 = vmatpush1.bf16.msra.mxu0 0
    %337 = vmatprep.subr.bf16.mxu0 0
    %338 = vmatpush1.bf16.msra.mxu0 0
    %339 = vmatprep.subr.bf16.mxu0 0
    %340 = vmatpush1.bf16.msra.mxu0 0
    %341 = vmatprep.subr.bf16.mxu0 0
    %342 = vmatpush1.bf16.msra.mxu0 0
    %343 = vmatprep.subr.bf16.mxu0 0
    %344 = vmatpush1.bf16.msra.mxu0 0
    %345 = vmatprep.subr.bf16.mxu0 0
    %346 = vmatpush1.bf16.msra.mxu0 0
    %347 = vmatprep.subr.bf16.mxu0 0
    %348 = vmatpush1.bf16.msra.mxu0 0
    %349 = vmatprep.mubr.bf16.mxu0 0
    %350 = vmatmul.mubr.bf16.gmra.mrb[0].mxu0 %v315
    %v351 = vpop.f32.mrb[0].mxu0
    %v352 = vadd.f32 %v297, %v351
    %v353 = vpop.f32.mrb[0].mxu0
    %v354 = vpop.f32.mrb[0].mxu0
    %v355 = vpop.f32.mrb[0].mxu0
    %356 = vdwg.mxu0
    %v357 = vmax.f32 %v352, 0.0
    %v358 = vpack.c.bf16 %v357, %v357
    %359 = vst [vmem:[#allocation2 + $0xc] sm:$0xf] %v358
    %v360 = vld [vmem:[%s0 + $0x8] sm:$0xff]
    %v361 = vpack.c.bf16 %v360, %v360
    %v362 = vld [vmem:[%s1] sm:$0xf]
    %v363 = vld [vmem:[%s1 + $0x4] sm:$0xf]
    %v364 = vld [vmem:[%s1 + $0x8] sm:$0xf]
    %v365 = vld [vmem:[%s1 + $0xc] sm:$0xf]
    %v366 = vld [vmem:[%s2] sm:$0x1]
    %v368 = vlaneseq
    %v369 = vshrl.u32 %v368, 7
    %v370 = vsub.s32 0, %v369
    %v371 = vrot.slane %v366, %v370
    %v377 = vunpack.c.l.b16 %v362
    %v378 = vunpack.c.l.b16 %v363
    %v379 = vunpack.c.l.b16 %v364
    %v380 = vunpack.c.l.b16 %v365
    %v381 = vpack.c.b16 %v378, %v377
    %v382 = vpack.c.b16 %v380, %v379
    %v386 = vsel %vm91, %v361, 0
    %388 = vmatprep.subr.bf16.mxu0 0
    %389 = vmatpush1.bf16.msra.mxu0 %v381
    %390 = vmatprep.subr.bf16.mxu0 0
    %391 = vmatpush1.bf16.msra.mxu0 %v382
    %392 = vmatprep.subr.bf16.mxu0 0
    %393 = vmatpush1.bf16.msra.mxu0 0
    %394 = vmatprep.subr.bf16.mxu0 0
    %395 = vmatpush1.bf16.msra.mxu0 0
    %396 = vmatprep.subr.bf16.mxu0 0
    %397 = vmatpush1.bf16.msra.mxu0 0
    %398 = vmatprep.subr.bf16.mxu0 0
    %399 = vmatpush1.bf16.msra.mxu0 0
    %400 = vmatprep.subr.bf16.mxu0 0
    %401 = vmatpush1.bf16.msra.mxu0 0
    %402 = vmatprep.subr.bf16.mxu0 0
    %403 = vmatpush1.bf16.msra.mxu0 0
    %404 = vmatprep.subr.bf16.mxu0 0
    %405 = vmatpush1.bf16.msra.mxu0 0
    %406 = vmatprep.subr.bf16.mxu0 0
    %407 = vmatpush1.bf16.msra.mxu0 0
    %408 = vmatprep.subr.bf16.mxu0 0
    %409 = vmatpush1.bf16.msra.mxu0 0
    %410 = vmatprep.subr.bf16.mxu0 0
    %411 = vmatpush1.bf16.msra.mxu0 0
    %412 = vmatprep.subr.bf16.mxu0 0
    %413 = vmatpush1.bf16.msra.mxu0 0
    %414 = vmatprep.subr.bf16.mxu0 0
    %415 = vmatpush1.bf16.msra.mxu0 0
    %416 = vmatprep.subr.bf16.mxu0 0
    %417 = vmatpush1.bf16.msra.mxu0 0
    %418 = vmatprep.subr.bf16.mxu0 0
    %419 = vmatpush1.bf16.msra.mxu0 0
    %420 = vmatprep.mubr.bf16.mxu0 0
    %421 = vmatmul.mubr.bf16.gmra.mrb[0].mxu0 %v386
    %v422 = vpop.f32.mrb[0].mxu0
    %v423 = vadd.f32 %v371, %v422
    %v424 = vpop.f32.mrb[0].mxu0
    %v425 = vpop.f32.mrb[0].mxu0
    %v426 = vpop.f32.mrb[0].mxu0
    %427 = vdwg.mxu0
    %v428 = vmax.f32 %v423, 0.0
    %v429 = vpack.c.bf16 %v428, %v428
    %430 = vst [vmem:[#allocation2 + $0x10] sm:$0xf] %v429
    %v431 = vld [vmem:[%s0 + $0x8] sm:$0xff]
    %v432 = vpack.c.bf16 %v431, %v431
    %v433 = vld [vmem:[%s1] sm:$0xf]
    %v434 = vld [vmem:[%s1 + $0x4] sm:$0xf]
    %v435 = vld [vmem:[%s1 + $0x8] sm:$0xf]
    %v436 = vld [vmem:[%s1 + $0xc] sm:$0xf]
    %v437 = vld [vmem:[%s2] sm:$0x1]
    %v439 = vlaneseq
    %v440 = vshrl.u32 %v439, 7
    %v441 = vsub.s32 0, %v440
    %v442 = vrot.slane %v437, %v441
    %445 = vrot.lane.b32.xlu0 %v432, 96
    %v446 = vpop.permute.xlu0 %445
    %v451 = vunpack.c.l.b16 %v433
    %v452 = vunpack.c.l.b16 %v434
    %v453 = vunpack.c.l.b16 %v435
    %v454 = vunpack.c.l.b16 %v436
    %v455 = vpack.c.b16 %v452, %v451
    %v456 = vpack.c.b16 %v454, %v453
    %v460 = vsel %vm91, %v446, 0
    %462 = vmatprep.subr.bf16.mxu0 0
    %463 = vmatpush1.bf16.msra.mxu0 %v455
    %464 = vmatprep.subr.bf16.mxu0 0
    %465 = vmatpush1.bf16.msra.mxu0 %v456
    %466 = vmatprep.subr.bf16.mxu0 0
    %467 = vmatpush1.bf16.msra.mxu0 0
    %468 = vmatprep.subr.bf16.mxu0 0
    %469 = vmatpush1.bf16.msra.mxu0 0
    %470 = vmatprep.subr.bf16.mxu0 0
    %471 = vmatpush1.bf16.msra.mxu0 0
    %472 = vmatprep.subr.bf16.mxu0 0
    %473 = vmatpush1.bf16.msra.mxu0 0
    %474 = vmatprep.subr.bf16.mxu0 0
    %475 = vmatpush1.bf16.msra.mxu0 0
    %476 = vmatprep.subr.bf16.mxu0 0
    %477 = vmatpush1.bf16.msra.mxu0 0
    %478 = vmatprep.subr.bf16.mxu0 0
    %479 = vmatpush1.bf16.msra.mxu0 0
    %480 = vmatprep.subr.bf16.mxu0 0
    %481 = vmatpush1.bf16.msra.mxu0 0
    %482 = vmatprep.subr.bf16.mxu0 0
    %483 = vmatpush1.bf16.msra.mxu0 0
    %484 = vmatprep.subr.bf16.mxu0 0
    %485 = vmatpush1.bf16.msra.mxu0 0
    %486 = vmatprep.subr.bf16.mxu0 0
    %487 = vmatpush1.bf16.msra.mxu0 0
    %488 = vmatprep.subr.bf16.mxu0 0
    %489 = vmatpush1.bf16.msra.mxu0 0
    %490 = vmatprep.subr.bf16.mxu0 0
    %491 = vmatpush1.bf16.msra.mxu0 0
    %492 = vmatprep.subr.bf16.mxu0 0
    %493 = vmatpush1.bf16.msra.mxu0 0
    %494 = vmatprep.mubr.bf16.mxu0 0
    %495 = vmatmul.mubr.bf16.gmra.mrb[0].mxu0 %v460
    %v496 = vpop.f32.mrb[0].mxu0
    %v497 = vadd.f32 %v442, %v496
    %v498 = vpop.f32.mrb[0].mxu0
    %v499 = vpop.f32.mrb[0].mxu0
    %v500 = vpop.f32.mrb[0].mxu0
    %501 = vdwg.mxu0
    %v502 = vmax.f32 %v497, 0.0
    %v503 = vpack.c.bf16 %v502, %v502
    %504 = vst [vmem:[#allocation2 + $0x14] sm:$0xf] %v503
    %v505 = vld [vmem:[%s0 + $0x8] sm:$0xff]
    %v506 = vpack.c.bf16 %v505, %v505
    %v507 = vld [vmem:[%s1] sm:$0xf]
    %v508 = vld [vmem:[%s1 + $0x4] sm:$0xf]
    %v509 = vld [vmem:[%s1 + $0x8] sm:$0xf]
    %v510 = vld [vmem:[%s1 + $0xc] sm:$0xf]
    %v511 = vld [vmem:[%s2] sm:$0x1]
    %v513 = vlaneseq
    %v514 = vshrl.u32 %v513, 7
    %v515 = vsub.s32 0, %v514
    %v516 = vrot.slane %v511, %v515
    %519 = vrot.lane.b32.xlu0 %v506, 64
    %v520 = vpop.permute.xlu0 %519
    %v525 = vunpack.c.l.b16 %v507
    %v526 = vunpack.c.l.b16 %v508
    %v527 = vunpack.c.l.b16 %v509
    %v528 = vunpack.c.l.b16 %v510
    %v529 = vpack.c.b16 %v526, %v525
    %v530 = vpack.c.b16 %v528, %v527
    %v534 = vsel %vm91, %v520, 0
    %536 = vmatprep.subr.bf16.mxu0 0
    %537 = vmatpush1.bf16.msra.mxu0 %v529
    %538 = vmatprep.subr.bf16.mxu0 0
    %539 = vmatpush1.bf16.msra.mxu0 %v530
    %540 = vmatprep.subr.bf16.mxu0 0
    %541 = vmatpush1.bf16.msra.mxu0 0
    %542 = vmatprep.subr.bf16.mxu0 0
    %543 = vmatpush1.bf16.msra.mxu0 0
    %544 = vmatprep.subr.bf16.mxu0 0
    %545 = vmatpush1.bf16.msra.mxu0 0
    %546 = vmatprep.subr.bf16.mxu0 0
    %547 = vmatpush1.bf16.msra.mxu0 0
    %548 = vmatprep.subr.bf16.mxu0 0
    %549 = vmatpush1.bf16.msra.mxu0 0
    %550 = vmatprep.subr.bf16.mxu0 0
    %551 = vmatpush1.bf16.msra.mxu0 0
    %552 = vmatprep.subr.bf16.mxu0 0
    %553 = vmatpush1.bf16.msra.mxu0 0
    %554 = vmatprep.subr.bf16.mxu0 0
    %555 = vmatpush1.bf16.msra.mxu0 0
    %556 = vmatprep.subr.bf16.mxu0 0
    %557 = vmatpush1.bf16.msra.mxu0 0
    %558 = vmatprep.subr.bf16.mxu0 0
    %559 = vmatpush1.bf16.msra.mxu0 0
    %560 = vmatprep.subr.bf16.mxu0 0
    %561 = vmatpush1.bf16.msra.mxu0 0
    %562 = vmatprep.subr.bf16.mxu0 0
    %563 = vmatpush1.bf16.msra.mxu0 0
    %564 = vmatprep.subr.bf16.mxu0 0
    %565 = vmatpush1.bf16.msra.mxu0 0
    %566 = vmatprep.subr.bf16.mxu0 0
    %567 = vmatpush1.bf16.msra.mxu0 0
    %568 = vmatprep.mubr.bf16.mxu0 0
    %569 = vmatmul.mubr.bf16.gmra.mrb[0].mxu0 %v534
    %v570 = vpop.f32.mrb[0].mxu0
    %v571 = vadd.f32 %v516, %v570
    %v572 = vpop.f32.mrb[0].mxu0
    %v573 = vpop.f32.mrb[0].mxu0
    %v574 = vpop.f32.mrb[0].mxu0
    %575 = vdwg.mxu0
    %v576 = vmax.f32 %v571, 0.0
    %v577 = vpack.c.bf16 %v576, %v576
    %578 = vst [vmem:[#allocation2 + $0x18] sm:$0xf] %v577
    %v579 = vld [vmem:[%s0 + $0x8] sm:$0xff]
    %v580 = vpack.c.bf16 %v579, %v579
    %v581 = vld [vmem:[%s1] sm:$0xf]
    %v582 = vld [vmem:[%s1 + $0x4] sm:$0xf]
    %v583 = vld [vmem:[%s1 + $0x8] sm:$0xf]
    %v584 = vld [vmem:[%s1 + $0xc] sm:$0xf]
    %v585 = vld [vmem:[%s2] sm:$0x1]
    %v587 = vlaneseq
    %v588 = vshrl.u32 %v587, 7
    %v589 = vsub.s32 0, %v588
    %v590 = vrot.slane %v585, %v589
    %593 = vrot.lane.b32.xlu0 %v580, 32
    %v594 = vpop.permute.xlu0 %593
    %v599 = vunpack.c.l.b16 %v581
    %v600 = vunpack.c.l.b16 %v582
    %v601 = vunpack.c.l.b16 %v583
    %v602 = vunpack.c.l.b16 %v584
    %v603 = vpack.c.b16 %v600, %v599
    %v604 = vpack.c.b16 %v602, %v601
    %v608 = vsel %vm91, %v594, 0
    %610 = vmatprep.subr.bf16.mxu0 0
    %611 = vmatpush1.bf16.msra.mxu0 %v603
    %612 = vmatprep.subr.bf16.mxu0 0
    %613 = vmatpush1.bf16.msra.mxu0 %v604
    %614 = vmatprep.subr.bf16.mxu0 0
    %615 = vmatpush1.bf16.msra.mxu0 0
    %616 = vmatprep.subr.bf16.mxu0 0
    %617 = vmatpush1.bf16.msra.mxu0 0
    %618 = vmatprep.subr.bf16.mxu0 0
    %619 = vmatpush1.bf16.msra.mxu0 0
    %620 = vmatprep.subr.bf16.mxu0 0
    %621 = vmatpush1.bf16.msra.mxu0 0
    %622 = vmatprep.subr.bf16.mxu0 0
    %623 = vmatpush1.bf16.msra.mxu0 0
    %624 = vmatprep.subr.bf16.mxu0 0
    %625 = vmatpush1.bf16.msra.mxu0 0
    %626 = vmatprep.subr.bf16.mxu0 0
    %627 = vmatpush1.bf16.msra.mxu0 0
    %628 = vmatprep.subr.bf16.mxu0 0
    %629 = vmatpush1.bf16.msra.mxu0 0
    %630 = vmatprep.subr.bf16.mxu0 0
    %631 = vmatpush1.bf16.msra.mxu0 0
    %632 = vmatprep.subr.bf16.mxu0 0
    %633 = vmatpush1.bf16.msra.mxu0 0
    %634 = vmatprep.subr.bf16.mxu0 0
    %635 = vmatpush1.bf16.msra.mxu0 0
    %636 = vmatprep.subr.bf16.mxu0 0
    %637 = vmatpush1.bf16.msra.mxu0 0
    %638 = vmatprep.subr.bf16.mxu0 0
    %639 = vmatpush1.bf16.msra.mxu0 0
    %640 = vmatprep.subr.bf16.mxu0 0
    %641 = vmatpush1.bf16.msra.mxu0 0
    %642 = vmatprep.mubr.bf16.mxu0 0
    %643 = vmatmul.mubr.bf16.gmra.mrb[0].mxu0 %v608
    %v644 = vpop.f32.mrb[0].mxu0
    %v645 = vadd.f32 %v590, %v644
    %v646 = vpop.f32.mrb[0].mxu0
    %v647 = vpop.f32.mrb[0].mxu0
    %v648 = vpop.f32.mrb[0].mxu0
    %649 = vdwg.mxu0
    %v650 = vmax.f32 %v645, 0.0
    %v651 = vpack.c.bf16 %v650, %v650
    %652 = vst [vmem:[#allocation2 + $0x1c] sm:$0xf] %v651
    %v653 = vld [vmem:[#allocation2] sm:$0xff]
    %v654 = vld [vmem:[#allocation2 + $0x8] sm:$0xff]
    %v655 = vld [vmem:[#allocation2 + $0x10] sm:$0xff]
    %v656 = vld [vmem:[#allocation2 + $0x18] sm:$0xff]
    %v657 = vld [vmem:[#allocation3] sm:$0xf]
    %v658 = vld [vmem:[#allocation3 + $0x4] sm:$0xf]
    %v659 = vld [vmem:[#allocation3 + $0x8] sm:$0xf]
    %v660 = vld [vmem:[#allocation3 + $0xc] sm:$0xf]
    %v661 = vld [vmem:[#allocation3 + $0x10] sm:$0xf]
    %v662 = vld [vmem:[#allocation3 + $0x14] sm:$0xf]
    %v663 = vld [vmem:[#allocation3 + $0x18] sm:$0xf]
    %v664 = vld [vmem:[#allocation3 + $0x1c] sm:$0xf]
    %v665 = vld [vmem:[#allocation3 + $0x20] sm:$0xf]
    %v666 = vld [vmem:[#allocation3 + $0x24] sm:$0xf]
    %v667 = vld [vmem:[#allocation3 + $0x28] sm:$0xf]
    %v668 = vld [vmem:[#allocation3 + $0x2c] sm:$0xf]
    %v669 = vld [vmem:[#allocation3 + $0x30] sm:$0xf]
    %v670 = vld [vmem:[#allocation3 + $0x34] sm:$0xf]
    %v671 = vld [vmem:[#allocation3 + $0x38] sm:$0xf]
    %v672 = vld [vmem:[#allocation3 + $0x3c] sm:$0xf]
    %v673 = vld [vmem:[#allocation3 + $0x40] sm:$0xf]
    %v674 = vld [vmem:[#allocation3 + $0x44] sm:$0xf]
    %v675 = vld [vmem:[#allocation3 + $0x48] sm:$0xf]
    %v676 = vld [vmem:[#allocation3 + $0x4c] sm:$0xf]
    %v677 = vld [vmem:[#allocation3 + $0x50] sm:$0xf]
    %v678 = vld [vmem:[#allocation3 + $0x54] sm:$0xf]
    %v679 = vld [vmem:[#allocation3 + $0x58] sm:$0xf]
    %v680 = vld [vmem:[#allocation3 + $0x5c] sm:$0xf]
    %v681 = vld [vmem:[#allocation3 + $0x60] sm:$0xf]
    %v682 = vld [vmem:[#allocation3 + $0x64] sm:$0xf]
    %v683 = vld [vmem:[#allocation3 + $0x68] sm:$0xf]
    %v684 = vld [vmem:[#allocation3 + $0x6c] sm:$0xf]
    %v685 = vld [vmem:[#allocation3 + $0x70] sm:$0xf]
    %v686 = vld [vmem:[#allocation3 + $0x74] sm:$0xf]
    %v687 = vld [vmem:[#allocation3 + $0x78] sm:$0xf]
    %v688 = vld [vmem:[#allocation3 + $0x7c] sm:$0xf]
    %v689 = vld [vmem:[#allocation3 + $0x80] sm:$0xf]
    %v690 = vld [vmem:[#allocation3 + $0x84] sm:$0xf]
    %v691 = vld [vmem:[#allocation3 + $0x88] sm:$0xf]
    %v692 = vld [vmem:[#allocation3 + $0x8c] sm:$0xf]
    %v693 = vld [vmem:[#allocation3 + $0x90] sm:$0xf]
    %v694 = vld [vmem:[#allocation3 + $0x94] sm:$0xf]
    %v695 = vld [vmem:[#allocation3 + $0x98] sm:$0xf]
    %v696 = vld [vmem:[#allocation3 + $0x9c] sm:$0xf]
    %v697 = vld [vmem:[#allocation3 + $0xa0] sm:$0xf]
    %v698 = vld [vmem:[#allocation3 + $0xa4] sm:$0xf]
    %v699 = vld [vmem:[#allocation3 + $0xa8] sm:$0xf]
    %v700 = vld [vmem:[#allocation3 + $0xac] sm:$0xf]
    %v701 = vld [vmem:[#allocation3 + $0xb0] sm:$0xf]
    %v702 = vld [vmem:[#allocation3 + $0xb4] sm:$0xf]
    %v703 = vld [vmem:[#allocation3 + $0xb8] sm:$0xf]
    %v704 = vld [vmem:[#allocation3 + $0xbc] sm:$0xf]
    %v705 = vld [vmem:[#allocation3 + $0xc0] sm:$0xf]
    %v706 = vld [vmem:[#allocation3 + $0xc4] sm:$0xf]
    %v707 = vld [vmem:[#allocation3 + $0xc8] sm:$0xf]
    %v708 = vld [vmem:[#allocation3 + $0xcc] sm:$0xf]
    %v709 = vld [vmem:[#allocation3 + $0xd0] sm:$0xf]
    %v710 = vld [vmem:[#allocation3 + $0xd4] sm:$0xf]
    %v711 = vld [vmem:[#allocation3 + $0xd8] sm:$0xf]
    %v712 = vld [vmem:[#allocation3 + $0xdc] sm:$0xf]
    %v713 = vld [vmem:[#allocation3 + $0xe0] sm:$0xf]
    %v714 = vld [vmem:[#allocation3 + $0xe4] sm:$0xf]
    %v715 = vld [vmem:[#allocation3 + $0xe8] sm:$0xf]
    %v716 = vld [vmem:[#allocation3 + $0xec] sm:$0xf]
    %v717 = vld [vmem:[#allocation3 + $0xf0] sm:$0xf]
    %v718 = vld [vmem:[#allocation3 + $0xf4] sm:$0xf]
    %v719 = vld [vmem:[#allocation3 + $0xf8] sm:$0xf]
    %v720 = vld [vmem:[#allocation3 + $0xfc] sm:$0xf]
    %v721 = vld [vmem:[#allocation3 + $0x100] sm:$0xf]
    %v722 = vld [vmem:[#allocation3 + $0x104] sm:$0xf]
    %v723 = vld [vmem:[#allocation3 + $0x108] sm:$0xf]
    %v724 = vld [vmem:[#allocation3 + $0x10c] sm:$0xf]
    %v725 = vld [vmem:[#allocation3 + $0x110] sm:$0xf]
    %v726 = vld [vmem:[#allocation3 + $0x114] sm:$0xf]
    %v727 = vld [vmem:[#allocation3 + $0x118] sm:$0xf]
    %v728 = vld [vmem:[#allocation3 + $0x11c] sm:$0xf]
    %v729 = vld [vmem:[#allocation3 + $0x120] sm:$0xf]
    %v730 = vld [vmem:[#allocation3 + $0x124] sm:$0xf]
    %v731 = vld [vmem:[#allocation3 + $0x128] sm:$0xf]
    %v732 = vld [vmem:[#allocation3 + $0x12c] sm:$0xf]
    %v733 = vld [vmem:[#allocation3 + $0x130] sm:$0xf]
    %v734 = vld [vmem:[#allocation3 + $0x134] sm:$0xf]
    %v735 = vld [vmem:[#allocation3 + $0x138] sm:$0xf]
    %v736 = vld [vmem:[#allocation3 + $0x13c] sm:$0xf]
    %v737 = vld [vmem:[#allocation3 + $0x140] sm:$0xf]
    %v738 = vld [vmem:[#allocation3 + $0x144] sm:$0xf]
    %v739 = vld [vmem:[#allocation3 + $0x148] sm:$0xf]
    %v740 = vld [vmem:[#allocation3 + $0x14c] sm:$0xf]
    %v741 = vld [vmem:[#allocation3 + $0x150] sm:$0xf]
    %v742 = vld [vmem:[#allocation3 + $0x154] sm:$0xf]
    %v743 = vld [vmem:[#allocation3 + $0x158] sm:$0xf]
    %v744 = vld [vmem:[#allocation3 + $0x15c] sm:$0xf]
    %v745 = vld [vmem:[#allocation3 + $0x160] sm:$0xf]
    %v746 = vld [vmem:[#allocation3 + $0x164] sm:$0xf]
    %v747 = vld [vmem:[#allocation3 + $0x168] sm:$0xf]
    %v748 = vld [vmem:[#allocation3 + $0x16c] sm:$0xf]
    %v749 = vld [vmem:[#allocation3 + $0x170] sm:$0xf]
    %v750 = vld [vmem:[#allocation3 + $0x174] sm:$0xf]
    %v751 = vld [vmem:[#allocation3 + $0x178] sm:$0xf]
    %v752 = vld [vmem:[#allocation3 + $0x17c] sm:$0xf]
    %v753 = vld [vmem:[#allocation3 + $0x180] sm:$0xf]
    %v754 = vld [vmem:[#allocation3 + $0x184] sm:$0xf]
    %v755 = vld [vmem:[#allocation3 + $0x188] sm:$0xf]
    %v756 = vld [vmem:[#allocation3 + $0x18c] sm:$0xf]
    %v757 = vld [vmem:[#allocation3 + $0x190] sm:$0xf]
    %v758 = vld [vmem:[#allocation3 + $0x194] sm:$0xf]
    %v759 = vld [vmem:[#allocation3 + $0x198] sm:$0xf]
    %v760 = vld [vmem:[#allocation3 + $0x19c] sm:$0xf]
    %v761 = vld [vmem:[#allocation3 + $0x1a0] sm:$0xf]
    %v762 = vld [vmem:[#allocation3 + $0x1a4] sm:$0xf]
    %v763 = vld [vmem:[#allocation3 + $0x1a8] sm:$0xf]
    %v764 = vld [vmem:[#allocation3 + $0x1ac] sm:$0xf]
    %v765 = vld [vmem:[#allocation3 + $0x1b0] sm:$0xf]
    %v766 = vld [vmem:[#allocation3 + $0x1b4] sm:$0xf]
    %v767 = vld [vmem:[#allocation3 + $0x1b8] sm:$0xf]
    %v768 = vld [vmem:[#allocation3 + $0x1bc] sm:$0xf]
    %v769 = vld [vmem:[#allocation3 + $0x1c0] sm:$0xf]
    %v770 = vld [vmem:[#allocation3 + $0x1c4] sm:$0xf]
    %v771 = vld [vmem:[#allocation3 + $0x1c8] sm:$0xf]
    %v772 = vld [vmem:[#allocation3 + $0x1cc] sm:$0xf]
    %v773 = vld [vmem:[#allocation3 + $0x1d0] sm:$0xf]
    %v774 = vld [vmem:[#allocation3 + $0x1d4] sm:$0xf]
    %v775 = vld [vmem:[#allocation3 + $0x1d8] sm:$0xf]
    %v776 = vld [vmem:[#allocation3 + $0x1dc] sm:$0xf]
    %v777 = vld [vmem:[#allocation3 + $0x1e0] sm:$0xf]
    %v778 = vld [vmem:[#allocation3 + $0x1e4] sm:$0xf]
    %v779 = vld [vmem:[#allocation3 + $0x1e8] sm:$0xf]
    %v780 = vld [vmem:[#allocation3 + $0x1ec] sm:$0xf]
    %v781 = vld [vmem:[#allocation3 + $0x1f0] sm:$0xf]
    %v782 = vld [vmem:[#allocation3 + $0x1f4] sm:$0xf]
    %v783 = vld [vmem:[#allocation3 + $0x1f8] sm:$0xf]
    %v784 = vld [vmem:[#allocation3 + $0x1fc] sm:$0xf]
    %v785 = vld [vmem:[%s4] sm:$0x1]
    %v787 = vlaneseq
    %v788 = vshrl.u32 %v787, 7
    %v789 = vsub.s32 0, %v788
    %v790 = vrot.slane %v785, %v789
    %v796 = vunpack.c.l.b16 %v653
    %v797 = vunpack.c.h.b16 %v653
    %v798 = vunpack.c.l.b16 %v654
    %v799 = vunpack.c.h.b16 %v654
    %v800 = vunpack.c.l.b16 %v655
    %v801 = vunpack.c.h.b16 %v655
    %v802 = vunpack.c.l.b16 %v656
    %v803 = vunpack.c.h.b16 %v656
    %v804 = vpack.c.b16 %v796, %v796
    %v805 = vpack.c.b16 %v797, %v797
    %v806 = vpack.c.b16 %v798, %v798
    %v807 = vpack.c.b16 %v799, %v799
    %v808 = vpack.c.b16 %v800, %v800
    %v809 = vpack.c.b16 %v801, %v801
    %v810 = vpack.c.b16 %v802, %v802
    %v811 = vpack.c.b16 %v803, %v803
    %v948 = vunpack.c.l.b16 %v657
    %v949 = vunpack.c.l.b16 %v658
    %v950 = vunpack.c.l.b16 %v659
    %v951 = vunpack.c.l.b16 %v660
    %v952 = vunpack.c.l.b16 %v661
    %v953 = vunpack.c.l.b16 %v662
    %v954 = vunpack.c.l.b16 %v663
    %v955 = vunpack.c.l.b16 %v664
    %v956 = vunpack.c.l.b16 %v665
    %v957 = vunpack.c.l.b16 %v666
    %v958 = vunpack.c.l.b16 %v667
    %v959 = vunpack.c.l.b16 %v668
    %v960 = vunpack.c.l.b16 %v669
    %v961 = vunpack.c.l.b16 %v670
    %v962 = vunpack.c.l.b16 %v671
    %v963 = vunpack.c.l.b16 %v672
    %v964 = vunpack.c.l.b16 %v673
    %v965 = vunpack.c.l.b16 %v674
    %v966 = vunpack.c.l.b16 %v675
    %v967 = vunpack.c.l.b16 %v676
    %v968 = vunpack.c.l.b16 %v677
    %v969 = vunpack.c.l.b16 %v678
    %v970 = vunpack.c.l.b16 %v679
    %v971 = vunpack.c.l.b16 %v680
    %v972 = vunpack.c.l.b16 %v681
    %v973 = vunpack.c.l.b16 %v682
    %v974 = vunpack.c.l.b16 %v683
    %v975 = vunpack.c.l.b16 %v684
    %v976 = vunpack.c.l.b16 %v685
    %v977 = vunpack.c.l.b16 %v686
    %v978 = vunpack.c.l.b16 %v687
    %v979 = vunpack.c.l.b16 %v688
    %v980 = vunpack.c.l.b16 %v689
    %v981 = vunpack.c.l.b16 %v690
    %v982 = vunpack.c.l.b16 %v691
    %v983 = vunpack.c.l.b16 %v692
    %v984 = vunpack.c.l.b16 %v693
    %v985 = vunpack.c.l.b16 %v694
    %v986 = vunpack.c.l.b16 %v695
    %v987 = vunpack.c.l.b16 %v696
    %v988 = vunpack.c.l.b16 %v697
    %v989 = vunpack.c.l.b16 %v698
    %v990 = vunpack.c.l.b16 %v699
    %v991 = vunpack.c.l.b16 %v700
    %v992 = vunpack.c.l.b16 %v701
    %v993 = vunpack.c.l.b16 %v702
    %v994 = vunpack.c.l.b16 %v703
    %v995 = vunpack.c.l.b16 %v704
    %v996 = vunpack.c.l.b16 %v705
    %v997 = vunpack.c.l.b16 %v706
    %v998 = vunpack.c.l.b16 %v707
    %v999 = vunpack.c.l.b16 %v708
    %v1000 = vunpack.c.l.b16 %v709
    %v1001 = vunpack.c.l.b16 %v710
    %v1002 = vunpack.c.l.b16 %v711
    %v1003 = vunpack.c.l.b16 %v712
    %v1004 = vunpack.c.l.b16 %v713
    %v1005 = vunpack.c.l.b16 %v714
    %v1006 = vunpack.c.l.b16 %v715
    %v1007 = vunpack.c.l.b16 %v716
    %v1008 = vunpack.c.l.b16 %v717
    %v1009 = vunpack.c.l.b16 %v718
    %v1010 = vunpack.c.l.b16 %v719
    %v1011 = vunpack.c.l.b16 %v720
    %v1012 = vunpack.c.l.b16 %v721
    %v1013 = vunpack.c.l.b16 %v722
    %v1014 = vunpack.c.l.b16 %v723
    %v1015 = vunpack.c.l.b16 %v724
    %v1016 = vunpack.c.l.b16 %v725
    %v1017 = vunpack.c.l.b16 %v726
    %v1018 = vunpack.c.l.b16 %v727
    %v1019 = vunpack.c.l.b16 %v728
    %v1020 = vunpack.c.l.b16 %v729
    %v1021 = vunpack.c.l.b16 %v730
    %v1022 = vunpack.c.l.b16 %v731
    %v1023 = vunpack.c.l.b16 %v732
    %v1024 = vunpack.c.l.b16 %v733
    %v1025 = vunpack.c.l.b16 %v734
    %v1026 = vunpack.c.l.b16 %v735
    %v1027 = vunpack.c.l.b16 %v736
    %v1028 = vunpack.c.l.b16 %v737
    %v1029 = vunpack.c.l.b16 %v738
    %v1030 = vunpack.c.l.b16 %v739
    %v1031 = vunpack.c.l.b16 %v740
    %v1032 = vunpack.c.l.b16 %v741
    %v1033 = vunpack.c.l.b16 %v742
    %v1034 = vunpack.c.l.b16 %v743
    %v1035 = vunpack.c.l.b16 %v744
    %v1036 = vunpack.c.l.b16 %v745
    %v1037 = vunpack.c.l.b16 %v746
    %v1038 = vunpack.c.l.b16 %v747
    %v1039 = vunpack.c.l.b16 %v748
    %v1040 = vunpack.c.l.b16 %v749
    %v1041 = vunpack.c.l.b16 %v750
    %v1042 = vunpack.c.l.b16 %v751
    %v1043 = vunpack.c.l.b16 %v752
    %v1044 = vunpack.c.l.b16 %v753
    %v1045 = vunpack.c.l.b16 %v754
    %v1046 = vunpack.c.l.b16 %v755
    %v1047 = vunpack.c.l.b16 %v756
    %v1048 = vunpack.c.l.b16 %v757
    %v1049 = vunpack.c.l.b16 %v758
    %v1050 = vunpack.c.l.b16 %v759
    %v1051 = vunpack.c.l.b16 %v760
    %v1052 = vunpack.c.l.b16 %v761
    %v1053 = vunpack.c.l.b16 %v762
    %v1054 = vunpack.c.l.b16 %v763
    %v1055 = vunpack.c.l.b16 %v764
    %v1056 = vunpack.c.l.b16 %v765
    %v1057 = vunpack.c.l.b16 %v766
    %v1058 = vunpack.c.l.b16 %v767
    %v1059 = vunpack.c.l.b16 %v768
    %v1060 = vunpack.c.l.b16 %v769
    %v1061 = vunpack.c.l.b16 %v770
    %v1062 = vunpack.c.l.b16 %v771
    %v1063 = vunpack.c.l.b16 %v772
    %v1064 = vunpack.c.l.b16 %v773
    %v1065 = vunpack.c.l.b16 %v774
    %v1066 = vunpack.c.l.b16 %v775
    %v1067 = vunpack.c.l.b16 %v776
    %v1068 = vunpack.c.l.b16 %v777
    %v1069 = vunpack.c.l.b16 %v778
    %v1070 = vunpack.c.l.b16 %v779
    %v1071 = vunpack.c.l.b16 %v780
    %v1072 = vunpack.c.l.b16 %v781
    %v1073 = vunpack.c.l.b16 %v782
    %v1074 = vunpack.c.l.b16 %v783
    %v1075 = vunpack.c.l.b16 %v784
    %v1076 = vpack.c.b16 %v949, %v948
    %v1077 = vpack.c.b16 %v951, %v950
    %v1078 = vpack.c.b16 %v953, %v952
    %v1079 = vpack.c.b16 %v955, %v954
    %v1080 = vpack.c.b16 %v957, %v956
    %v1081 = vpack.c.b16 %v959, %v958
    %v1082 = vpack.c.b16 %v961, %v960
    %v1083 = vpack.c.b16 %v963, %v962
    %v1084 = vpack.c.b16 %v965, %v964
    %v1085 = vpack.c.b16 %v967, %v966
    %v1086 = vpack.c.b16 %v969, %v968
    %v1087 = vpack.c.b16 %v971, %v970
    %v1088 = vpack.c.b16 %v973, %v972
    %v1089 = vpack.c.b16 %v975, %v974
    %v1090 = vpack.c.b16 %v977, %v976
    %v1091 = vpack.c.b16 %v979, %v978
    %v1092 = vpack.c.b16 %v981, %v980
    %v1093 = vpack.c.b16 %v983, %v982
    %v1094 = vpack.c.b16 %v985, %v984
    %v1095 = vpack.c.b16 %v987, %v986
    %v1096 = vpack.c.b16 %v989, %v988
    %v1097 = vpack.c.b16 %v991, %v990
    %v1098 = vpack.c.b16 %v993, %v992
    %v1099 = vpack.c.b16 %v995, %v994
    %v1100 = vpack.c.b16 %v997, %v996
    %v1101 = vpack.c.b16 %v999, %v998
    %v1102 = vpack.c.b16 %v1001, %v1000
    %v1103 = vpack.c.b16 %v1003, %v1002
    %v1104 = vpack.c.b16 %v1005, %v1004
    %v1105 = vpack.c.b16 %v1007, %v1006
    %v1106 = vpack.c.b16 %v1009, %v1008
    %v1107 = vpack.c.b16 %v1011, %v1010
    %v1108 = vpack.c.b16 %v1013, %v1012
    %v1109 = vpack.c.b16 %v1015, %v1014
    %v1110 = vpack.c.b16 %v1017, %v1016
    %v1111 = vpack.c.b16 %v1019, %v1018
    %v1112 = vpack.c.b16 %v1021, %v1020
    %v1113 = vpack.c.b16 %v1023, %v1022
    %v1114 = vpack.c.b16 %v1025, %v1024
    %v1115 = vpack.c.b16 %v1027, %v1026
    %v1116 = vpack.c.b16 %v1029, %v1028
    %v1117 = vpack.c.b16 %v1031, %v1030
    %v1118 = vpack.c.b16 %v1033, %v1032
    %v1119 = vpack.c.b16 %v1035, %v1034
    %v1120 = vpack.c.b16 %v1037, %v1036
    %v1121 = vpack.c.b16 %v1039, %v1038
    %v1122 = vpack.c.b16 %v1041, %v1040
    %v1123 = vpack.c.b16 %v1043, %v1042
    %v1124 = vpack.c.b16 %v1045, %v1044
    %v1125 = vpack.c.b16 %v1047, %v1046
    %v1126 = vpack.c.b16 %v1049, %v1048
    %v1127 = vpack.c.b16 %v1051, %v1050
    %v1128 = vpack.c.b16 %v1053, %v1052
    %v1129 = vpack.c.b16 %v1055, %v1054
    %v1130 = vpack.c.b16 %v1057, %v1056
    %v1131 = vpack.c.b16 %v1059, %v1058
    %v1132 = vpack.c.b16 %v1061, %v1060
    %v1133 = vpack.c.b16 %v1063, %v1062
    %v1134 = vpack.c.b16 %v1065, %v1064
    %v1135 = vpack.c.b16 %v1067, %v1066
    %v1136 = vpack.c.b16 %v1069, %v1068
    %v1137 = vpack.c.b16 %v1071, %v1070
    %v1138 = vpack.c.b16 %v1073, %v1072
    %v1139 = vpack.c.b16 %v1075, %v1074
    %1204 = vmatprep.subr.bf16.mxu0 0
    %1205 = vmatpush1.bf16.msra.mxu0 %v1076
    %1206 = vmatprep.subr.bf16.mxu0 0
    %1207 = vmatpush1.bf16.msra.mxu0 %v1077
    %1208 = vmatprep.subr.bf16.mxu0 0
    %1209 = vmatpush1.bf16.msra.mxu0 %v1078
    %1210 = vmatprep.subr.bf16.mxu0 0
    %1211 = vmatpush1.bf16.msra.mxu0 %v1079
    %1212 = vmatprep.subr.bf16.mxu0 0
    %1213 = vmatpush1.bf16.msra.mxu0 %v1080
    %1214 = vmatprep.subr.bf16.mxu0 0
    %1215 = vmatpush1.bf16.msra.mxu0 %v1081
    %1216 = vmatprep.subr.bf16.mxu0 0
    %1217 = vmatpush1.bf16.msra.mxu0 %v1082
    %1218 = vmatprep.subr.bf16.mxu0 0
    %1219 = vmatpush1.bf16.msra.mxu0 %v1083
    %1220 = vmatprep.subr.bf16.mxu0 0
    %1221 = vmatpush1.bf16.msra.mxu0 %v1084
    %1222 = vmatprep.subr.bf16.mxu0 0
    %1223 = vmatpush1.bf16.msra.mxu0 %v1085
    %1224 = vmatprep.subr.bf16.mxu0 0
    %1225 = vmatpush1.bf16.msra.mxu0 %v1086
    %1226 = vmatprep.subr.bf16.mxu0 0
    %1227 = vmatpush1.bf16.msra.mxu0 %v1087
    %1228 = vmatprep.subr.bf16.mxu0 0
    %1229 = vmatpush1.bf16.msra.mxu0 %v1088
    %1230 = vmatprep.subr.bf16.mxu0 0
    %1231 = vmatpush1.bf16.msra.mxu0 %v1089
    %1232 = vmatprep.subr.bf16.mxu0 0
    %1233 = vmatpush1.bf16.msra.mxu0 %v1090
    %1234 = vmatprep.subr.bf16.mxu0 0
    %1235 = vmatpush1.bf16.msra.mxu0 %v1091
    %1236 = vmatprep.mubr.bf16.mxu0 %v805
    %1237 = vmatmul.mubr.bf16.gmra.mrb[0].mxu0 %v804
    %v1238 = vpop.f32.mrb[0].mxu0
    %v1239 = vadd.f32 %v790, %v1238
    %v1240 = vpop.f32.mrb[0].mxu0
    %v1241 = vpop.f32.mrb[0].mxu0
    %v1242 = vpop.f32.mrb[0].mxu0
    %1243 = vdwg.mxu0
    %1244 = vmatprep.subr.bf16.mxu0 0
    %1245 = vmatpush1.bf16.msra.mxu0 %v1092
    %1246 = vmatprep.subr.bf16.mxu0 0
    %1247 = vmatpush1.bf16.msra.mxu0 %v1093
    %1248 = vmatprep.subr.bf16.mxu0 0
    %1249 = vmatpush1.bf16.msra.mxu0 %v1094
    %1250 = vmatprep.subr.bf16.mxu0 0
    %1251 = vmatpush1.bf16.msra.mxu0 %v1095
    %1252 = vmatprep.subr.bf16.mxu0 0
    %1253 = vmatpush1.bf16.msra.mxu0 %v1096
    %1254 = vmatprep.subr.bf16.mxu0 0
    %1255 = vmatpush1.bf16.msra.mxu0 %v1097
    %1256 = vmatprep.subr.bf16.mxu0 0
    %1257 = vmatpush1.bf16.msra.mxu0 %v1098
    %1258 = vmatprep.subr.bf16.mxu0 0
    %1259 = vmatpush1.bf16.msra.mxu0 %v1099
    %1260 = vmatprep.subr.bf16.mxu0 0
    %1261 = vmatpush1.bf16.msra.mxu0 %v1100
    %1262 = vmatprep.subr.bf16.mxu0 0
    %1263 = vmatpush1.bf16.msra.mxu0 %v1101
    %1264 = vmatprep.subr.bf16.mxu0 0
    %1265 = vmatpush1.bf16.msra.mxu0 %v1102
    %1266 = vmatprep.subr.bf16.mxu0 0
    %1267 = vmatpush1.bf16.msra.mxu0 %v1103
    %1268 = vmatprep.subr.bf16.mxu0 0
    %1269 = vmatpush1.bf16.msra.mxu0 %v1104
    %1270 = vmatprep.subr.bf16.mxu0 0
    %1271 = vmatpush1.bf16.msra.mxu0 %v1105
    %1272 = vmatprep.subr.bf16.mxu0 0
    %1273 = vmatpush1.bf16.msra.mxu0 %v1106
    %1274 = vmatprep.subr.bf16.mxu0 0
    %1275 = vmatpush1.bf16.msra.mxu0 %v1107
    %1276 = vmatprep.mubr.bf16.mxu0 %v807
    %1277 = vmatmul.mubr.bf16.gmra.mrb[0].mxu0 %v806
    %v1278 = vpop.f32.mrb[0].mxu0
    %v1279 = vadd.f32 %v1239, %v1278
    %v1280 = vpop.f32.mrb[0].mxu0
    %v1281 = vpop.f32.mrb[0].mxu0
    %v1282 = vpop.f32.mrb[0].mxu0
    %1283 = vdwg.mxu0
    %1284 = vmatprep.subr.bf16.mxu0 0
    %1285 = vmatpush1.bf16.msra.mxu0 %v1108
    %1286 = vmatprep.subr.bf16.mxu0 0
    %1287 = vmatpush1.bf16.msra.mxu0 %v1109
    %1288 = vmatprep.subr.bf16.mxu0 0
    %1289 = vmatpush1.bf16.msra.mxu0 %v1110
    %1290 = vmatprep.subr.bf16.mxu0 0
    %1291 = vmatpush1.bf16.msra.mxu0 %v1111
    %1292 = vmatprep.subr.bf16.mxu0 0
    %1293 = vmatpush1.bf16.msra.mxu0 %v1112
    %1294 = vmatprep.subr.bf16.mxu0 0
    %1295 = vmatpush1.bf16.msra.mxu0 %v1113
    %1296 = vmatprep.subr.bf16.mxu0 0
    %1297 = vmatpush1.bf16.msra.mxu0 %v1114
    %1298 = vmatprep.subr.bf16.mxu0 0
    %1299 = vmatpush1.bf16.msra.mxu0 %v1115
    %1300 = vmatprep.subr.bf16.mxu0 0
    %1301 = vmatpush1.bf16.msra.mxu0 %v1116
    %1302 = vmatprep.subr.bf16.mxu0 0
    %1303 = vmatpush1.bf16.msra.mxu0 %v1117
    %1304 = vmatprep.subr.bf16.mxu0 0
    %1305 = vmatpush1.bf16.msra.mxu0 %v1118
    %1306 = vmatprep.subr.bf16.mxu0 0
    %1307 = vmatpush1.bf16.msra.mxu0 %v1119
    %1308 = vmatprep.subr.bf16.mxu0 0
    %1309 = vmatpush1.bf16.msra.mxu0 %v1120
    %1310 = vmatprep.subr.bf16.mxu0 0
    %1311 = vmatpush1.bf16.msra.mxu0 %v1121
    %1312 = vmatprep.subr.bf16.mxu0 0
    %1313 = vmatpush1.bf16.msra.mxu0 %v1122
    %1314 = vmatprep.subr.bf16.mxu0 0
    %1315 = vmatpush1.bf16.msra.mxu0 %v1123
    %1316 = vmatprep.mubr.bf16.mxu0 %v809
    %1317 = vmatmul.mubr.bf16.gmra.mrb[0].mxu0 %v808
    %v1318 = vpop.f32.mrb[0].mxu0
    %v1319 = vadd.f32 %v1279, %v1318
    %v1320 = vpop.f32.mrb[0].mxu0
    %v1321 = vpop.f32.mrb[0].mxu0
    %v1322 = vpop.f32.mrb[0].mxu0
    %1323 = vdwg.mxu0
    %1324 = vmatprep.subr.bf16.mxu0 0
    %1325 = vmatpush1.bf16.msra.mxu0 %v1124
    %1326 = vmatprep.subr.bf16.mxu0 0
    %1327 = vmatpush1.bf16.msra.mxu0 %v1125
    %1328 = vmatprep.subr.bf16.mxu0 0
    %1329 = vmatpush1.bf16.msra.mxu0 %v1126
    %1330 = vmatprep.subr.bf16.mxu0 0
    %1331 = vmatpush1.bf16.msra.mxu0 %v1127
    %1332 = vmatprep.subr.bf16.mxu0 0
    %1333 = vmatpush1.bf16.msra.mxu0 %v1128
    %1334 = vmatprep.subr.bf16.mxu0 0
    %1335 = vmatpush1.bf16.msra.mxu0 %v1129
    %1336 = vmatprep.subr.bf16.mxu0 0
    %1337 = vmatpush1.bf16.msra.mxu0 %v1130
    %1338 = vmatprep.subr.bf16.mxu0 0
    %1339 = vmatpush1.bf16.msra.mxu0 %v1131
    %1340 = vmatprep.subr.bf16.mxu0 0
    %1341 = vmatpush1.bf16.msra.mxu0 %v1132
    %1342 = vmatprep.subr.bf16.mxu0 0
    %1343 = vmatpush1.bf16.msra.mxu0 %v1133
    %1344 = vmatprep.subr.bf16.mxu0 0
    %1345 = vmatpush1.bf16.msra.mxu0 %v1134
    %1346 = vmatprep.subr.bf16.mxu0 0
    %1347 = vmatpush1.bf16.msra.mxu0 %v1135
    %1348 = vmatprep.subr.bf16.mxu0 0
    %1349 = vmatpush1.bf16.msra.mxu0 %v1136
    %1350 = vmatprep.subr.bf16.mxu0 0
    %1351 = vmatpush1.bf16.msra.mxu0 %v1137
    %1352 = vmatprep.subr.bf16.mxu0 0
    %1353 = vmatpush1.bf16.msra.mxu0 %v1138
    %1354 = vmatprep.subr.bf16.mxu0 0
    %1355 = vmatpush1.bf16.msra.mxu0 %v1139
    %1356 = vmatprep.mubr.bf16.mxu0 %v811
    %1357 = vmatmul.mubr.bf16.gmra.mrb[0].mxu0 %v810
    %v1358 = vpop.f32.mrb[0].mxu0
    %v1359 = vadd.f32 %v1319, %v1358
    %v1360 = vpop.f32.mrb[0].mxu0
    %v1361 = vpop.f32.mrb[0].mxu0
    %v1362 = vpop.f32.mrb[0].mxu0
    %1363 = vdwg.mxu0
    %v1364 = vmax.f32 %v1359, 0.0
    %1365 = vst [vmem:[#allocation9] sm:$0xff] %v1364
    %v1366 = vpack.c.bf16 %v1364, %v1364
    %v1367 = vld [vmem:[#allocation6] sm:$0xff]
    %v1368 = vld [vmem:[#allocation6 + $0x8] sm:$0xff]
    %v1369 = vld [vmem:[#allocation6 + $0x10] sm:$0xff]
    %v1370 = vld [vmem:[#allocation6 + $0x18] sm:$0xff]
    %v1371 = vld [vmem:[#allocation6 + $0x20] sm:$0xff]
    %v1372 = vld [vmem:[#allocation6 + $0x28] sm:$0xff]
    %v1373 = vld [vmem:[#allocation6 + $0x30] sm:$0xff]
    %v1374 = vld [vmem:[#allocation6 + $0x38] sm:$0xff]
    %v1375 = vld [vmem:[#allocation6 + $0x40] sm:$0xff]
    %v1376 = vld [vmem:[#allocation6 + $0x48] sm:$0xff]
    %v1377 = vld [vmem:[#allocation6 + $0x50] sm:$0xff]
    %v1378 = vld [vmem:[#allocation6 + $0x58] sm:$0xff]
    %v1379 = vld [vmem:[#allocation6 + $0x60] sm:$0xff]
    %v1380 = vld [vmem:[#allocation6 + $0x68] sm:$0xff]
    %v1381 = vld [vmem:[#allocation6 + $0x70] sm:$0xff]
    %v1382 = vld [vmem:[#allocation6 + $0x78] sm:$0xff]
    %v1383 = vld [vmem:[#allocation6 + $0x80] sm:$0xff]
    %v1384 = vld [vmem:[#allocation6 + $0x88] sm:$0xff]
    %v1385 = vld [vmem:[#allocation6 + $0x90] sm:$0xff]
    %v1386 = vld [vmem:[#allocation6 + $0x98] sm:$0xff]
    %v1387 = vld [vmem:[#allocation6 + $0xa0] sm:$0xff]
    %v1388 = vld [vmem:[#allocation6 + $0xa8] sm:$0xff]
    %v1389 = vld [vmem:[#allocation6 + $0xb0] sm:$0xff]
    %v1390 = vld [vmem:[#allocation6 + $0xb8] sm:$0xff]
    %v1391 = vld [vmem:[#allocation6 + $0xc0] sm:$0xff]
    %v1392 = vld [vmem:[#allocation6 + $0xc8] sm:$0xff]
    %v1393 = vld [vmem:[#allocation6 + $0xd0] sm:$0xff]
    %v1394 = vld [vmem:[#allocation6 + $0xd8] sm:$0xff]
    %v1395 = vld [vmem:[#allocation6 + $0xe0] sm:$0xff]
    %v1396 = vld [vmem:[#allocation6 + $0xe8] sm:$0xff]
    %v1397 = vld [vmem:[#allocation6 + $0xf0] sm:$0xff]
    %v1398 = vld [vmem:[#allocation6 + $0xf8] sm:$0xff]
    %v1399 = vld [vmem:[#allocation6 + $0x100] sm:$0xff]
    %v1400 = vld [vmem:[#allocation6 + $0x108] sm:$0xff]
    %v1401 = vld [vmem:[#allocation6 + $0x110] sm:$0xff]
    %v1402 = vld [vmem:[#allocation6 + $0x118] sm:$0xff]
    %v1403 = vld [vmem:[#allocation6 + $0x120] sm:$0xff]
    %v1404 = vld [vmem:[#allocation6 + $0x128] sm:$0xff]
    %v1405 = vld [vmem:[#allocation6 + $0x130] sm:$0xff]
    %v1406 = vld [vmem:[#allocation6 + $0x138] sm:$0xff]
    %v1407 = vld [vmem:[#allocation6 + $0x140] sm:$0xff]
    %v1408 = vld [vmem:[#allocation6 + $0x148] sm:$0xff]
    %v1409 = vld [vmem:[#allocation6 + $0x150] sm:$0xff]
    %v1410 = vld [vmem:[#allocation6 + $0x158] sm:$0xff]
    %v1411 = vld [vmem:[#allocation6 + $0x160] sm:$0xff]
    %v1412 = vld [vmem:[#allocation6 + $0x168] sm:$0xff]
    %v1413 = vld [vmem:[#allocation6 + $0x170] sm:$0xff]
    %v1414 = vld [vmem:[#allocation6 + $0x178] sm:$0xff]
    %v1415 = vld [vmem:[#allocation6 + $0x180] sm:$0xff]
    %v1416 = vld [vmem:[#allocation6 + $0x188] sm:$0xff]
    %v1417 = vld [vmem:[#allocation6 + $0x190] sm:$0xff]
    %v1418 = vld [vmem:[#allocation6 + $0x198] sm:$0xff]
    %v1419 = vld [vmem:[#allocation6 + $0x1a0] sm:$0xff]
    %v1420 = vld [vmem:[#allocation6 + $0x1a8] sm:$0xff]
    %v1421 = vld [vmem:[#allocation6 + $0x1b0] sm:$0xff]
    %v1422 = vld [vmem:[#allocation6 + $0x1b8] sm:$0xff]
    %v1423 = vld [vmem:[#allocation6 + $0x1c0] sm:$0xff]
    %v1424 = vld [vmem:[#allocation6 + $0x1c8] sm:$0xff]
    %v1425 = vld [vmem:[#allocation6 + $0x1d0] sm:$0xff]
    %v1426 = vld [vmem:[#allocation6 + $0x1d8] sm:$0xff]
    %v1427 = vld [vmem:[#allocation6 + $0x1e0] sm:$0xff]
    %v1428 = vld [vmem:[#allocation6 + $0x1e8] sm:$0xff]
    %v1429 = vld [vmem:[#allocation6 + $0x1f0] sm:$0xff]
    %v1430 = vld [vmem:[#allocation6 + $0x1f8] sm:$0xff]
    %v1431 = vld [vmem:[%s6] sm:$0xff]
    %v1433 = vlaneseq
    %v1434 = vshrl.u32 %v1433, 7
    %v1435 = vsub.s32 0, %v1434
    %v1436 = vrot.slane %v1431, %v1435
    %v1437 = vlaneseq
    %v1438 = vshrl.u32 %v1437, 7
    %v1439 = vsub.s32 1, %v1438
    %v1440 = vrot.slane %v1431, %v1439
    %v1441 = vlaneseq
    %v1442 = vshrl.u32 %v1441, 7
    %v1443 = vsub.s32 2, %v1442
    %v1444 = vrot.slane %v1431, %v1443
    %v1445 = vlaneseq
    %v1446 = vshrl.u32 %v1445, 7
    %v1447 = vsub.s32 3, %v1446
    %v1448 = vrot.slane %v1431, %v1447
    %v1449 = vlaneseq
    %v1450 = vshrl.u32 %v1449, 7
    %v1451 = vsub.s32 4, %v1450
    %v1452 = vrot.slane %v1431, %v1451
    %v1453 = vlaneseq
    %v1454 = vshrl.u32 %v1453, 7
    %v1455 = vsub.s32 5, %v1454
    %v1456 = vrot.slane %v1431, %v1455
    %v1457 = vlaneseq
    %v1458 = vshrl.u32 %v1457, 7
    %v1459 = vsub.s32 6, %v1458
    %v1460 = vrot.slane %v1431, %v1459
    %v1461 = vlaneseq
    %v1462 = vshrl.u32 %v1461, 7
    %v1463 = vsub.s32 7, %v1462
    %v1464 = vrot.slane %v1431, %v1463
    %v1537 = vunpack.c.l.b16 %v1367
    %v1538 = vunpack.c.h.b16 %v1367
    %v1539 = vunpack.c.l.b16 %v1368
    %v1540 = vunpack.c.h.b16 %v1368
    %v1541 = vunpack.c.l.b16 %v1369
    %v1542 = vunpack.c.h.b16 %v1369
    %v1543 = vunpack.c.l.b16 %v1370
    %v1544 = vunpack.c.h.b16 %v1370
    %v1545 = vunpack.c.l.b16 %v1371
    %v1546 = vunpack.c.h.b16 %v1371
    %v1547 = vunpack.c.l.b16 %v1372
    %v1548 = vunpack.c.h.b16 %v1372
    %v1549 = vunpack.c.l.b16 %v1373
    %v1550 = vunpack.c.h.b16 %v1373
    %v1551 = vunpack.c.l.b16 %v1374
    %v1552 = vunpack.c.h.b16 %v1374
    %v1553 = vunpack.c.l.b16 %v1375
    %v1554 = vunpack.c.h.b16 %v1375
    %v1555 = vunpack.c.l.b16 %v1376
    %v1556 = vunpack.c.h.b16 %v1376
    %v1557 = vunpack.c.l.b16 %v1377
    %v1558 = vunpack.c.h.b16 %v1377
    %v1559 = vunpack.c.l.b16 %v1378
    %v1560 = vunpack.c.h.b16 %v1378
    %v1561 = vunpack.c.l.b16 %v1379
    %v1562 = vunpack.c.h.b16 %v1379
    %v1563 = vunpack.c.l.b16 %v1380
    %v1564 = vunpack.c.h.b16 %v1380
    %v1565 = vunpack.c.l.b16 %v1381
    %v1566 = vunpack.c.h.b16 %v1381
    %v1567 = vunpack.c.l.b16 %v1382
    %v1568 = vunpack.c.h.b16 %v1382
    %v1569 = vunpack.c.l.b16 %v1383
    %v1570 = vunpack.c.h.b16 %v1383
    %v1571 = vunpack.c.l.b16 %v1384
    %v1572 = vunpack.c.h.b16 %v1384
    %v1573 = vunpack.c.l.b16 %v1385
    %v1574 = vunpack.c.h.b16 %v1385
    %v1575 = vunpack.c.l.b16 %v1386
    %v1576 = vunpack.c.h.b16 %v1386
    %v1577 = vunpack.c.l.b16 %v1387
    %v1578 = vunpack.c.h.b16 %v1387
    %v1579 = vunpack.c.l.b16 %v1388
    %v1580 = vunpack.c.h.b16 %v1388
    %v1581 = vunpack.c.l.b16 %v1389
    %v1582 = vunpack.c.h.b16 %v1389
    %v1583 = vunpack.c.l.b16 %v1390
    %v1584 = vunpack.c.h.b16 %v1390
    %v1585 = vunpack.c.l.b16 %v1391
    %v1586 = vunpack.c.h.b16 %v1391
    %v1587 = vunpack.c.l.b16 %v1392
    %v1588 = vunpack.c.h.b16 %v1392
    %v1589 = vunpack.c.l.b16 %v1393
    %v1590 = vunpack.c.h.b16 %v1393
    %v1591 = vunpack.c.l.b16 %v1394
    %v1592 = vunpack.c.h.b16 %v1394
    %v1593 = vunpack.c.l.b16 %v1395
    %v1594 = vunpack.c.h.b16 %v1395
    %v1595 = vunpack.c.l.b16 %v1396
    %v1596 = vunpack.c.h.b16 %v1396
    %v1597 = vunpack.c.l.b16 %v1397
    %v1598 = vunpack.c.h.b16 %v1397
    %v1599 = vunpack.c.l.b16 %v1398
    %v1600 = vunpack.c.h.b16 %v1398
    %v1601 = vunpack.c.l.b16 %v1399
    %v1602 = vunpack.c.h.b16 %v1399
    %v1603 = vunpack.c.l.b16 %v1400
    %v1604 = vunpack.c.h.b16 %v1400
    %v1605 = vunpack.c.l.b16 %v1401
    %v1606 = vunpack.c.h.b16 %v1401
    %v1607 = vunpack.c.l.b16 %v1402
    %v1608 = vunpack.c.h.b16 %v1402
    %v1609 = vunpack.c.l.b16 %v1403
    %v1610 = vunpack.c.h.b16 %v1403
    %v1611 = vunpack.c.l.b16 %v1404
    %v1612 = vunpack.c.h.b16 %v1404
    %v1613 = vunpack.c.l.b16 %v1405
    %v1614 = vunpack.c.h.b16 %v1405
    %v1615 = vunpack.c.l.b16 %v1406
    %v1616 = vunpack.c.h.b16 %v1406
    %v1617 = vunpack.c.l.b16 %v1407
    %v1618 = vunpack.c.h.b16 %v1407
    %v1619 = vunpack.c.l.b16 %v1408
    %v1620 = vunpack.c.h.b16 %v1408
    %v1621 = vunpack.c.l.b16 %v1409
    %v1622 = vunpack.c.h.b16 %v1409
    %v1623 = vunpack.c.l.b16 %v1410
    %v1624 = vunpack.c.h.b16 %v1410
    %v1625 = vunpack.c.l.b16 %v1411
    %v1626 = vunpack.c.h.b16 %v1411
    %v1627 = vunpack.c.l.b16 %v1412
    %v1628 = vunpack.c.h.b16 %v1412
    %v1629 = vunpack.c.l.b16 %v1413
    %v1630 = vunpack.c.h.b16 %v1413
    %v1631 = vunpack.c.l.b16 %v1414
    %v1632 = vunpack.c.h.b16 %v1414
    %v1633 = vunpack.c.l.b16 %v1415
    %v1634 = vunpack.c.h.b16 %v1415
    %v1635 = vunpack.c.l.b16 %v1416
    %v1636 = vunpack.c.h.b16 %v1416
    %v1637 = vunpack.c.l.b16 %v1417
    %v1638 = vunpack.c.h.b16 %v1417
    %v1639 = vunpack.c.l.b16 %v1418
    %v1640 = vunpack.c.h.b16 %v1418
    %v1641 = vunpack.c.l.b16 %v1419
    %v1642 = vunpack.c.h.b16 %v1419
    %v1643 = vunpack.c.l.b16 %v1420
    %v1644 = vunpack.c.h.b16 %v1420
    %v1645 = vunpack.c.l.b16 %v1421
    %v1646 = vunpack.c.h.b16 %v1421
    %v1647 = vunpack.c.l.b16 %v1422
    %v1648 = vunpack.c.h.b16 %v1422
    %v1649 = vunpack.c.l.b16 %v1423
    %v1650 = vunpack.c.h.b16 %v1423
    %v1651 = vunpack.c.l.b16 %v1424
    %v1652 = vunpack.c.h.b16 %v1424
    %v1653 = vunpack.c.l.b16 %v1425
    %v1654 = vunpack.c.h.b16 %v1425
    %v1655 = vunpack.c.l.b16 %v1426
    %v1656 = vunpack.c.h.b16 %v1426
    %v1657 = vunpack.c.l.b16 %v1427
    %v1658 = vunpack.c.h.b16 %v1427
    %v1659 = vunpack.c.l.b16 %v1428
    %v1660 = vunpack.c.h.b16 %v1428
    %v1661 = vunpack.c.l.b16 %v1429
    %v1662 = vunpack.c.h.b16 %v1429
    %v1663 = vunpack.c.l.b16 %v1430
    %v1664 = vunpack.c.h.b16 %v1430
    %v1665 = vpack.c.b16 %v1545, %v1537
    %v1666 = vpack.c.b16 %v1546, %v1538
    %v1667 = vpack.c.b16 %v1547, %v1539
    %v1668 = vpack.c.b16 %v1548, %v1540
    %v1669 = vpack.c.b16 %v1549, %v1541
    %v1670 = vpack.c.b16 %v1550, %v1542
    %v1671 = vpack.c.b16 %v1551, %v1543
    %v1672 = vpack.c.b16 %v1552, %v1544
    %v1673 = vpack.c.b16 %v1561, %v1553
    %v1674 = vpack.c.b16 %v1562, %v1554
    %v1675 = vpack.c.b16 %v1563, %v1555
    %v1676 = vpack.c.b16 %v1564, %v1556
    %v1677 = vpack.c.b16 %v1565, %v1557
    %v1678 = vpack.c.b16 %v1566, %v1558
    %v1679 = vpack.c.b16 %v1567, %v1559
    %v1680 = vpack.c.b16 %v1568, %v1560
    %v1681 = vpack.c.b16 %v1577, %v1569
    %v1682 = vpack.c.b16 %v1578, %v1570
    %v1683 = vpack.c.b16 %v1579, %v1571
    %v1684 = vpack.c.b16 %v1580, %v1572
    %v1685 = vpack.c.b16 %v1581, %v1573
    %v1686 = vpack.c.b16 %v1582, %v1574
    %v1687 = vpack.c.b16 %v1583, %v1575
    %v1688 = vpack.c.b16 %v1584, %v1576
    %v1689 = vpack.c.b16 %v1593, %v1585
    %v1690 = vpack.c.b16 %v1594, %v1586
    %v1691 = vpack.c.b16 %v1595, %v1587
    %v1692 = vpack.c.b16 %v1596, %v1588
    %v1693 = vpack.c.b16 %v1597, %v1589
    %v1694 = vpack.c.b16 %v1598, %v1590
    %v1695 = vpack.c.b16 %v1599, %v1591
    %v1696 = vpack.c.b16 %v1600, %v1592
    %v1697 = vpack.c.b16 %v1609, %v1601
    %v1698 = vpack.c.b16 %v1610, %v1602
    %v1699 = vpack.c.b16 %v1611, %v1603
    %v1700 = vpack.c.b16 %v1612, %v1604
    %v1701 = vpack.c.b16 %v1613, %v1605
    %v1702 = vpack.c.b16 %v1614, %v1606
    %v1703 = vpack.c.b16 %v1615, %v1607
    %v1704 = vpack.c.b16 %v1616, %v1608
    %v1705 = vpack.c.b16 %v1625, %v1617
    %v1706 = vpack.c.b16 %v1626, %v1618
    %v1707 = vpack.c.b16 %v1627, %v1619
    %v1708 = vpack.c.b16 %v1628, %v1620
    %v1709 = vpack.c.b16 %v1629, %v1621
    %v1710 = vpack.c.b16 %v1630, %v1622
    %v1711 = vpack.c.b16 %v1631, %v1623
    %v1712 = vpack.c.b16 %v1632, %v1624
    %v1713 = vpack.c.b16 %v1641, %v1633
    %v1714 = vpack.c.b16 %v1642, %v1634
    %v1715 = vpack.c.b16 %v1643, %v1635
    %v1716 = vpack.c.b16 %v1644, %v1636
    %v1717 = vpack.c.b16 %v1645, %v1637
    %v1718 = vpack.c.b16 %v1646, %v1638
    %v1719 = vpack.c.b16 %v1647, %v1639
    %v1720 = vpack.c.b16 %v1648, %v1640
    %v1721 = vpack.c.b16 %v1657, %v1649
    %v1722 = vpack.c.b16 %v1658, %v1650
    %v1723 = vpack.c.b16 %v1659, %v1651
    %v1724 = vpack.c.b16 %v1660, %v1652
    %v1725 = vpack.c.b16 %v1661, %v1653
    %v1726 = vpack.c.b16 %v1662, %v1654
    %v1727 = vpack.c.b16 %v1663, %v1655
    %v1728 = vpack.c.b16 %v1664, %v1656
    %1793 = vmatprep.subr.bf16.mxu0 %v1666
    %1794 = vmatpush1.bf16.msra.mxu0 %v1665
    %1795 = vmatprep.subr.bf16.mxu0 %v1674
    %1796 = vmatpush1.bf16.msra.mxu0 %v1673
    %1797 = vmatprep.subr.bf16.mxu0 %v1682
    %1798 = vmatpush1.bf16.msra.mxu0 %v1681
    %1799 = vmatprep.subr.bf16.mxu0 %v1690
    %1800 = vmatpush1.bf16.msra.mxu0 %v1689
    %1801 = vmatprep.subr.bf16.mxu0 %v1698
    %1802 = vmatpush1.bf16.msra.mxu0 %v1697
    %1803 = vmatprep.subr.bf16.mxu0 %v1706
    %1804 = vmatpush1.bf16.msra.mxu0 %v1705
    %1805 = vmatprep.subr.bf16.mxu0 %v1714
    %1806 = vmatpush1.bf16.msra.mxu0 %v1713
    %1807 = vmatprep.subr.bf16.mxu0 %v1722
    %1808 = vmatpush1.bf16.msra.mxu0 %v1721
    %1809 = vmatprep.subr.bf16.mxu0 0
    %1810 = vmatpush1.bf16.msra.mxu0 0
    %1811 = vmatprep.subr.bf16.mxu0 0
    %1812 = vmatpush1.bf16.msra.mxu0 0
    %1813 = vmatprep.subr.bf16.mxu0 0
    %1814 = vmatpush1.bf16.msra.mxu0 0
    %1815 = vmatprep.subr.bf16.mxu0 0
    %1816 = vmatpush1.bf16.msra.mxu0 0
    %1817 = vmatprep.subr.bf16.mxu0 0
    %1818 = vmatpush1.bf16.msra.mxu0 0
    %1819 = vmatprep.subr.bf16.mxu0 0
    %1820 = vmatpush1.bf16.msra.mxu0 0
    %1821 = vmatprep.subr.bf16.mxu0 0
    %1822 = vmatpush1.bf16.msra.mxu0 0
    %1823 = vmatprep.subr.bf16.mxu0 0
    %1824 = vmatpush1.bf16.msra.mxu0 0
    %1825 = vmatprep.mubr.bf16.mxu0 0
    %1826 = vmatmul.mubr.bf16.gmra.mrb[0].mxu0 %v1366
    %v1827 = vpop.f32.mrb[0].mxu0
    %v1828 = vadd.f32 %v1436, %v1827
    %v1829 = vpop.f32.mrb[0].mxu0
    %v1830 = vadd.f32 %v1440, %v1829
    %v1831 = vpop.f32.mrb[0].mxu0
    %v1832 = vpop.f32.mrb[0].mxu0
    %1833 = vdwg.mxu0
    %1834 = vmatprep.subr.bf16.mxu0 %v1668
    %1835 = vmatpush1.bf16.msra.mxu0 %v1667
    %1836 = vmatprep.subr.bf16.mxu0 %v1676
    %1837 = vmatpush1.bf16.msra.mxu0 %v1675
    %1838 = vmatprep.subr.bf16.mxu0 %v1684
    %1839 = vmatpush1.bf16.msra.mxu0 %v1683
    %1840 = vmatprep.subr.bf16.mxu0 %v1692
    %1841 = vmatpush1.bf16.msra.mxu0 %v1691
    %1842 = vmatprep.subr.bf16.mxu0 %v1700
    %1843 = vmatpush1.bf16.msra.mxu0 %v1699
    %1844 = vmatprep.subr.bf16.mxu0 %v1708
    %1845 = vmatpush1.bf16.msra.mxu0 %v1707
    %1846 = vmatprep.subr.bf16.mxu0 %v1716
    %1847 = vmatpush1.bf16.msra.mxu0 %v1715
    %1848 = vmatprep.subr.bf16.mxu0 %v1724
    %1849 = vmatpush1.bf16.msra.mxu0 %v1723
    %1850 = vmatprep.subr.bf16.mxu0 0
    %1851 = vmatpush1.bf16.msra.mxu0 0
    %1852 = vmatprep.subr.bf16.mxu0 0
    %1853 = vmatpush1.bf16.msra.mxu0 0
    %1854 = vmatprep.subr.bf16.mxu0 0
    %1855 = vmatpush1.bf16.msra.mxu0 0
    %1856 = vmatprep.subr.bf16.mxu0 0
    %1857 = vmatpush1.bf16.msra.mxu0 0
    %1858 = vmatprep.subr.bf16.mxu0 0
    %1859 = vmatpush1.bf16.msra.mxu0 0
    %1860 = vmatprep.subr.bf16.mxu0 0
    %1861 = vmatpush1.bf16.msra.mxu0 0
    %1862 = vmatprep.subr.bf16.mxu0 0
    %1863 = vmatpush1.bf16.msra.mxu0 0
    %1864 = vmatprep.subr.bf16.mxu0 0
    %1865 = vmatpush1.bf16.msra.mxu0 0
    %1866 = vmatprep.mubr.bf16.mxu0 0
    %1867 = vmatmul.mubr.bf16.gmra.mrb[0].mxu0 %v1366
    %v1868 = vpop.f32.mrb[0].mxu0
    %v1869 = vadd.f32 %v1444, %v1868
    %v1870 = vpop.f32.mrb[0].mxu0
    %v1871 = vadd.f32 %v1448, %v1870
    %v1872 = vpop.f32.mrb[0].mxu0
    %v1873 = vpop.f32.mrb[0].mxu0
    %1874 = vdwg.mxu0
    %1875 = vmatprep.subr.bf16.mxu0 %v1670
    %1876 = vmatpush1.bf16.msra.mxu0 %v1669
    %1877 = vmatprep.subr.bf16.mxu0 %v1678
    %1878 = vmatpush1.bf16.msra.mxu0 %v1677
    %1879 = vmatprep.subr.bf16.mxu0 %v1686
    %1880 = vmatpush1.bf16.msra.mxu0 %v1685
    %1881 = vmatprep.subr.bf16.mxu0 %v1694
    %1882 = vmatpush1.bf16.msra.mxu0 %v1693
    %1883 = vmatprep.subr.bf16.mxu0 %v1702
    %1884 = vmatpush1.bf16.msra.mxu0 %v1701
    %1885 = vmatprep.subr.bf16.mxu0 %v1710
    %1886 = vmatpush1.bf16.msra.mxu0 %v1709
    %1887 = vmatprep.subr.bf16.mxu0 %v1718
    %1888 = vmatpush1.bf16.msra.mxu0 %v1717
    %1889 = vmatprep.subr.bf16.mxu0 %v1726
    %1890 = vmatpush1.bf16.msra.mxu0 %v1725
    %1891 = vmatprep.subr.bf16.mxu0 0
    %1892 = vmatpush1.bf16.msra.mxu0 0
    %1893 = vmatprep.subr.bf16.mxu0 0
    %1894 = vmatpush1.bf16.msra.mxu0 0
    %1895 = vmatprep.subr.bf16.mxu0 0
    %1896 = vmatpush1.bf16.msra.mxu0 0
    %1897 = vmatprep.subr.bf16.mxu0 0
    %1898 = vmatpush1.bf16.msra.mxu0 0
    %1899 = vmatprep.subr.bf16.mxu0 0
    %1900 = vmatpush1.bf16.msra.mxu0 0
    %1901 = vmatprep.subr.bf16.mxu0 0
    %1902 = vmatpush1.bf16.msra.mxu0 0
    %1903 = vmatprep.subr.bf16.mxu0 0
    %1904 = vmatpush1.bf16.msra.mxu0 0
    %1905 = vmatprep.subr.bf16.mxu0 0
    %1906 = vmatpush1.bf16.msra.mxu0 0
    %1907 = vmatprep.mubr.bf16.mxu0 0
    %1908 = vmatmul.mubr.bf16.gmra.mrb[0].mxu0 %v1366
    %v1909 = vpop.f32.mrb[0].mxu0
    %v1910 = vadd.f32 %v1452, %v1909
    %v1911 = vpop.f32.mrb[0].mxu0
    %v1912 = vadd.f32 %v1456, %v1911
    %v1913 = vpop.f32.mrb[0].mxu0
    %v1914 = vpop.f32.mrb[0].mxu0
    %1915 = vdwg.mxu0
    %1916 = vmatprep.subr.bf16.mxu0 %v1672
    %1917 = vmatpush1.bf16.msra.mxu0 %v1671
    %1918 = vmatprep.subr.bf16.mxu0 %v1680
    %1919 = vmatpush1.bf16.msra.mxu0 %v1679
    %1920 = vmatprep.subr.bf16.mxu0 %v1688
    %1921 = vmatpush1.bf16.msra.mxu0 %v1687
    %1922 = vmatprep.subr.bf16.mxu0 %v1696
    %1923 = vmatpush1.bf16.msra.mxu0 %v1695
    %1924 = vmatprep.subr.bf16.mxu0 %v1704
    %1925 = vmatpush1.bf16.msra.mxu0 %v1703
    %1926 = vmatprep.subr.bf16.mxu0 %v1712
    %1927 = vmatpush1.bf16.msra.mxu0 %v1711
    %1928 = vmatprep.subr.bf16.mxu0 %v1720
    %1929 = vmatpush1.bf16.msra.mxu0 %v1719
    %1930 = vmatprep.subr.bf16.mxu0 %v1728
    %1931 = vmatpush1.bf16.msra.mxu0 %v1727
    %1932 = vmatprep.subr.bf16.mxu0 0
    %1933 = vmatpush1.bf16.msra.mxu0 0
    %1934 = vmatprep.subr.bf16.mxu0 0
    %1935 = vmatpush1.bf16.msra.mxu0 0
    %1936 = vmatprep.subr.bf16.mxu0 0
    %1937 = vmatpush1.bf16.msra.mxu0 0
    %1938 = vmatprep.subr.bf16.mxu0 0
    %1939 = vmatpush1.bf16.msra.mxu0 0
    %1940 = vmatprep.subr.bf16.mxu0 0
    %1941 = vmatpush1.bf16.msra.mxu0 0
    %1942 = vmatprep.subr.bf16.mxu0 0
    %1943 = vmatpush1.bf16.msra.mxu0 0
    %1944 = vmatprep.subr.bf16.mxu0 0
    %1945 = vmatpush1.bf16.msra.mxu0 0
    %1946 = vmatprep.subr.bf16.mxu0 0
    %1947 = vmatpush1.bf16.msra.mxu0 0
    %1948 = vmatprep.mubr.bf16.mxu0 0
    %1949 = vmatmul.mubr.bf16.gmra.mrb[0].mxu0 %v1366
    %v1950 = vpop.f32.mrb[0].mxu0
    %v1951 = vadd.f32 %v1460, %v1950
    %v1952 = vpop.f32.mrb[0].mxu0
    %v1953 = vadd.f32 %v1464, %v1952
    %v1954 = vpop.f32.mrb[0].mxu0
    %v1955 = vpop.f32.mrb[0].mxu0
    %1956 = vdwg.mxu0
    %v1957 = vmax.f32 %v1828, 0.0
    %v1958 = vmax.f32 %v1830, 0.0
    %v1959 = vmax.f32 %v1869, 0.0
    %v1960 = vmax.f32 %v1871, 0.0
    %v1961 = vmax.f32 %v1910, 0.0
    %v1962 = vmax.f32 %v1912, 0.0
    %v1963 = vmax.f32 %v1951, 0.0
    %v1964 = vmax.f32 %v1953, 0.0
    %v1965 = vpack.c.bf16 %v1957, %v1957
    %v1966 = vld [vmem:[%s7] sm:$0xf]
    %v1967 = vld [vmem:[%s7 + $0x4] sm:$0xf]
    %v1968 = vld [vmem:[%s7 + $0x8] sm:$0xf]
    %v1969 = vld [vmem:[%s7 + $0xc] sm:$0xf]
    %v1970 = vld [vmem:[%s7 + $0x10] sm:$0xf]
    %v1971 = vld [vmem:[%s7 + $0x14] sm:$0xf]
    %v1972 = vld [vmem:[%s7 + $0x18] sm:$0xf]
    %v1973 = vld [vmem:[%s7 + $0x1c] sm:$0xf]
    %v1974 = vld [vmem:[%s7 + $0x20] sm:$0xf]
    %v1975 = vld [vmem:[%s7 + $0x24] sm:$0xf]
    %v1976 = vld [vmem:[%s7 + $0x28] sm:$0xf]
    %v1977 = vld [vmem:[%s7 + $0x2c] sm:$0xf]
    %v1978 = vld [vmem:[%s7 + $0x30] sm:$0xf]
    %v1979 = vld [vmem:[%s7 + $0x34] sm:$0xf]
    %v1980 = vld [vmem:[%s7 + $0x38] sm:$0xf]
    %v1981 = vld [vmem:[%s7 + $0x3c] sm:$0xf]
    %v1982 = vld [vmem:[%s8] sm:$0x1]
    %v1984 = vlaneseq
    %v1985 = vshrl.u32 %v1984, 7
    %v1986 = vsub.s32 0, %v1985
    %v1987 = vrot.slane %v1982, %v1986
    %v2005 = vunpack.c.l.b16 %v1966
    %v2006 = vunpack.c.l.b16 %v1967
    %v2007 = vunpack.c.l.b16 %v1968
    %v2008 = vunpack.c.l.b16 %v1969
    %v2009 = vunpack.c.l.b16 %v1970
    %v2010 = vunpack.c.l.b16 %v1971
    %v2011 = vunpack.c.l.b16 %v1972
    %v2012 = vunpack.c.l.b16 %v1973
    %v2013 = vunpack.c.l.b16 %v1974
    %v2014 = vunpack.c.l.b16 %v1975
    %v2015 = vunpack.c.l.b16 %v1976
    %v2016 = vunpack.c.l.b16 %v1977
    %v2017 = vunpack.c.l.b16 %v1978
    %v2018 = vunpack.c.l.b16 %v1979
    %v2019 = vunpack.c.l.b16 %v1980
    %v2020 = vunpack.c.l.b16 %v1981
    %v2021 = vpack.c.b16 %v2006, %v2005
    %v2022 = vpack.c.b16 %v2008, %v2007
    %v2023 = vpack.c.b16 %v2010, %v2009
    %v2024 = vpack.c.b16 %v2012, %v2011
    %v2025 = vpack.c.b16 %v2014, %v2013
    %v2026 = vpack.c.b16 %v2016, %v2015
    %v2027 = vpack.c.b16 %v2018, %v2017
    %v2028 = vpack.c.b16 %v2020, %v2019
    %2037 = vmatprep.subr.bf16.mxu0 0
    %2038 = vmatpush1.bf16.msra.mxu0 %v2021
    %2039 = vmatprep.subr.bf16.mxu0 0
    %2040 = vmatpush1.bf16.msra.mxu0 %v2022
    %2041 = vmatprep.subr.bf16.mxu0 0
    %2042 = vmatpush1.bf16.msra.mxu0 %v2023
    %2043 = vmatprep.subr.bf16.mxu0 0
    %2044 = vmatpush1.bf16.msra.mxu0 %v2024
    %2045 = vmatprep.subr.bf16.mxu0 0
    %2046 = vmatpush1.bf16.msra.mxu0 %v2025
    %2047 = vmatprep.subr.bf16.mxu0 0
    %2048 = vmatpush1.bf16.msra.mxu0 %v2026
    %2049 = vmatprep.subr.bf16.mxu0 0
    %2050 = vmatpush1.bf16.msra.mxu0 %v2027
    %2051 = vmatprep.subr.bf16.mxu0 0
    %2052 = vmatpush1.bf16.msra.mxu0 %v2028
    %2053 = vmatprep.subr.bf16.mxu0 0
    %2054 = vmatpush1.bf16.msra.mxu0 0
    %2055 = vmatprep.subr.bf16.mxu0 0
    %2056 = vmatpush1.bf16.msra.mxu0 0
    %2057 = vmatprep.subr.bf16.mxu0 0
    %2058 = vmatpush1.bf16.msra.mxu0 0
    %2059 = vmatprep.subr.bf16.mxu0 0
    %2060 = vmatpush1.bf16.msra.mxu0 0
    %2061 = vmatprep.subr.bf16.mxu0 0
    %2062 = vmatpush1.bf16.msra.mxu0 0
    %2063 = vmatprep.subr.bf16.mxu0 0
    %2064 = vmatpush1.bf16.msra.mxu0 0
    %2065 = vmatprep.subr.bf16.mxu0 0
    %2066 = vmatpush1.bf16.msra.mxu0 0
    %2067 = vmatprep.subr.bf16.mxu0 0
    %2068 = vmatpush1.bf16.msra.mxu0 0
    %2069 = vmatprep.mubr.bf16.mxu0 0
    %2070 = vmatmul.mubr.bf16.gmra.mrb[0].mxu0 %v1965
    %v2071 = vpop.f32.mrb[0].mxu0
    %v2072 = vadd.f32 %v1987, %v2071
    %v2073 = vpop.f32.mrb[0].mxu0
    %v2074 = vpop.f32.mrb[0].mxu0
    %v2075 = vpop.f32.mrb[0].mxu0
    %2076 = vdwg.mxu0
    %v2077 = vpack.c.bf16 %v1958, %v1958
    %2078 = vmatprep.subr.bf16.mxu0 0
    %2079 = vmatpush1.bf16.msra.mxu0 %v2021
    %2080 = vmatprep.subr.bf16.mxu0 0
    %2081 = vmatpush1.bf16.msra.mxu0 %v2022
    %2082 = vmatprep.subr.bf16.mxu0 0
    %2083 = vmatpush1.bf16.msra.mxu0 %v2023
    %2084 = vmatprep.subr.bf16.mxu0 0
    %2085 = vmatpush1.bf16.msra.mxu0 %v2024
    %2086 = vmatprep.subr.bf16.mxu0 0
    %2087 = vmatpush1.bf16.msra.mxu0 %v2025
    %2088 = vmatprep.subr.bf16.mxu0 0
    %2089 = vmatpush1.bf16.msra.mxu0 %v2026
    %2090 = vmatprep.subr.bf16.mxu0 0
    %2091 = vmatpush1.bf16.msra.mxu0 %v2027
    %2092 = vmatprep.subr.bf16.mxu0 0
    %2093 = vmatpush1.bf16.msra.mxu0 %v2028
    %2094 = vmatprep.subr.bf16.mxu0 0
    %2095 = vmatpush1.bf16.msra.mxu0 0
    %2096 = vmatprep.subr.bf16.mxu0 0
    %2097 = vmatpush1.bf16.msra.mxu0 0
    %2098 = vmatprep.subr.bf16.mxu0 0
    %2099 = vmatpush1.bf16.msra.mxu0 0
    %2100 = vmatprep.subr.bf16.mxu0 0
    %2101 = vmatpush1.bf16.msra.mxu0 0
    %2102 = vmatprep.subr.bf16.mxu0 0
    %2103 = vmatpush1.bf16.msra.mxu0 0
    %2104 = vmatprep.subr.bf16.mxu0 0
    %2105 = vmatpush1.bf16.msra.mxu0 0
    %2106 = vmatprep.subr.bf16.mxu0 0
    %2107 = vmatpush1.bf16.msra.mxu0 0
    %2108 = vmatprep.subr.bf16.mxu0 0
    %2109 = vmatpush1.bf16.msra.mxu0 0
    %2110 = vmatprep.mubr.bf16.mxu0 0
    %2111 = vmatmul.mubr.bf16.gmra.mrb[0].mxu0 %v2077
    %v2112 = vpop.f32.mrb[0].mxu0
    %v2113 = vadd.f32 %v1987, %v2112
    %v2114 = vpop.f32.mrb[0].mxu0
    %v2115 = vpop.f32.mrb[0].mxu0
    %v2116 = vpop.f32.mrb[0].mxu0
    %2117 = vdwg.mxu0
    %v2118 = vpack.c.bf16 %v1959, %v1959
    %2119 = vmatprep.subr.bf16.mxu0 0
    %2120 = vmatpush1.bf16.msra.mxu0 %v2021
    %2121 = vmatprep.subr.bf16.mxu0 0
    %2122 = vmatpush1.bf16.msra.mxu0 %v2022
    %2123 = vmatprep.subr.bf16.mxu0 0
    %2124 = vmatpush1.bf16.msra.mxu0 %v2023
    %2125 = vmatprep.subr.bf16.mxu0 0
    %2126 = vmatpush1.bf16.msra.mxu0 %v2024
    %2127 = vmatprep.subr.bf16.mxu0 0
    %2128 = vmatpush1.bf16.msra.mxu0 %v2025
    %2129 = vmatprep.subr.bf16.mxu0 0
    %2130 = vmatpush1.bf16.msra.mxu0 %v2026
    %2131 = vmatprep.subr.bf16.mxu0 0
    %2132 = vmatpush1.bf16.msra.mxu0 %v2027
    %2133 = vmatprep.subr.bf16.mxu0 0
    %2134 = vmatpush1.bf16.msra.mxu0 %v2028
    %2135 = vmatprep.subr.bf16.mxu0 0
    %2136 = vmatpush1.bf16.msra.mxu0 0
    %2137 = vmatprep.subr.bf16.mxu0 0
    %2138 = vmatpush1.bf16.msra.mxu0 0
    %2139 = vmatprep.subr.bf16.mxu0 0
    %2140 = vmatpush1.bf16.msra.mxu0 0
    %2141 = vmatprep.subr.bf16.mxu0 0
    %2142 = vmatpush1.bf16.msra.mxu0 0
    %2143 = vmatprep.subr.bf16.mxu0 0
    %2144 = vmatpush1.bf16.msra.mxu0 0
    %2145 = vmatprep.subr.bf16.mxu0 0
    %2146 = vmatpush1.bf16.msra.mxu0 0
    %2147 = vmatprep.subr.bf16.mxu0 0
    %2148 = vmatpush1.bf16.msra.mxu0 0
    %2149 = vmatprep.subr.bf16.mxu0 0
    %2150 = vmatpush1.bf16.msra.mxu0 0
    %2151 = vmatprep.mubr.bf16.mxu0 0
    %2152 = vmatmul.mubr.bf16.gmra.mrb[0].mxu0 %v2118
    %v2153 = vpop.f32.mrb[0].mxu0
    %v2154 = vadd.f32 %v1987, %v2153
    %v2155 = vpop.f32.mrb[0].mxu0
    %v2156 = vpop.f32.mrb[0].mxu0
    %v2157 = vpop.f32.mrb[0].mxu0
    %2158 = vdwg.mxu0
    %v2159 = vpack.c.bf16 %v1960, %v1960
    %2160 = vmatprep.subr.bf16.mxu0 0
    %2161 = vmatpush1.bf16.msra.mxu0 %v2021
    %2162 = vmatprep.subr.bf16.mxu0 0
    %2163 = vmatpush1.bf16.msra.mxu0 %v2022
    %2164 = vmatprep.subr.bf16.mxu0 0
    %2165 = vmatpush1.bf16.msra.mxu0 %v2023
    %2166 = vmatprep.subr.bf16.mxu0 0
    %2167 = vmatpush1.bf16.msra.mxu0 %v2024
    %2168 = vmatprep.subr.bf16.mxu0 0
    %2169 = vmatpush1.bf16.msra.mxu0 %v2025
    %2170 = vmatprep.subr.bf16.mxu0 0
    %2171 = vmatpush1.bf16.msra.mxu0 %v2026
    %2172 = vmatprep.subr.bf16.mxu0 0
    %2173 = vmatpush1.bf16.msra.mxu0 %v2027
    %2174 = vmatprep.subr.bf16.mxu0 0
    %2175 = vmatpush1.bf16.msra.mxu0 %v2028
    %2176 = vmatprep.subr.bf16.mxu0 0
    %2177 = vmatpush1.bf16.msra.mxu0 0
    %2178 = vmatprep.subr.bf16.mxu0 0
    %2179 = vmatpush1.bf16.msra.mxu0 0
    %2180 = vmatprep.subr.bf16.mxu0 0
    %2181 = vmatpush1.bf16.msra.mxu0 0
    %2182 = vmatprep.subr.bf16.mxu0 0
    %2183 = vmatpush1.bf16.msra.mxu0 0
    %2184 = vmatprep.subr.bf16.mxu0 0
    %2185 = vmatpush1.bf16.msra.mxu0 0
    %2186 = vmatprep.subr.bf16.mxu0 0
    %2187 = vmatpush1.bf16.msra.mxu0 0
    %2188 = vmatprep.subr.bf16.mxu0 0
    %2189 = vmatpush1.bf16.msra.mxu0 0
    %2190 = vmatprep.subr.bf16.mxu0 0
    %2191 = vmatpush1.bf16.msra.mxu0 0
    %2192 = vmatprep.mubr.bf16.mxu0 0
    %2193 = vmatmul.mubr.bf16.gmra.mrb[0].mxu0 %v2159
    %v2194 = vpop.f32.mrb[0].mxu0
    %v2195 = vadd.f32 %v1987, %v2194
    %v2196 = vpop.f32.mrb[0].mxu0
    %v2197 = vpop.f32.mrb[0].mxu0
    %v2198 = vpop.f32.mrb[0].mxu0
    %2199 = vdwg.mxu0
    %v2200 = vpack.c.bf16 %v1961, %v1961
    %2201 = vmatprep.subr.bf16.mxu0 0
    %2202 = vmatpush1.bf16.msra.mxu0 %v2021
    %2203 = vmatprep.subr.bf16.mxu0 0
    %2204 = vmatpush1.bf16.msra.mxu0 %v2022
    %2205 = vmatprep.subr.bf16.mxu0 0
    %2206 = vmatpush1.bf16.msra.mxu0 %v2023
    %2207 = vmatprep.subr.bf16.mxu0 0
    %2208 = vmatpush1.bf16.msra.mxu0 %v2024
    %2209 = vmatprep.subr.bf16.mxu0 0
    %2210 = vmatpush1.bf16.msra.mxu0 %v2025
    %2211 = vmatprep.subr.bf16.mxu0 0
    %2212 = vmatpush1.bf16.msra.mxu0 %v2026
    %2213 = vmatprep.subr.bf16.mxu0 0
    %2214 = vmatpush1.bf16.msra.mxu0 %v2027
    %2215 = vmatprep.subr.bf16.mxu0 0
    %2216 = vmatpush1.bf16.msra.mxu0 %v2028
    %2217 = vmatprep.subr.bf16.mxu0 0
    %2218 = vmatpush1.bf16.msra.mxu0 0
    %2219 = vmatprep.subr.bf16.mxu0 0
    %2220 = vmatpush1.bf16.msra.mxu0 0
    %2221 = vmatprep.subr.bf16.mxu0 0
    %2222 = vmatpush1.bf16.msra.mxu0 0
    %2223 = vmatprep.subr.bf16.mxu0 0
    %2224 = vmatpush1.bf16.msra.mxu0 0
    %2225 = vmatprep.subr.bf16.mxu0 0
    %2226 = vmatpush1.bf16.msra.mxu0 0
    %2227 = vmatprep.subr.bf16.mxu0 0
    %2228 = vmatpush1.bf16.msra.mxu0 0
    %2229 = vmatprep.subr.bf16.mxu0 0
    %2230 = vmatpush1.bf16.msra.mxu0 0
    %2231 = vmatprep.subr.bf16.mxu0 0
    %2232 = vmatpush1.bf16.msra.mxu0 0
    %2233 = vmatprep.mubr.bf16.mxu0 0
    %2234 = vmatmul.mubr.bf16.gmra.mrb[0].mxu0 %v2200
    %v2235 = vpop.f32.mrb[0].mxu0
    %v2236 = vadd.f32 %v1987, %v2235
    %v2237 = vpop.f32.mrb[0].mxu0
    %v2238 = vpop.f32.mrb[0].mxu0
    %v2239 = vpop.f32.mrb[0].mxu0
    %2240 = vdwg.mxu0
    %v2241 = vpack.c.bf16 %v1962, %v1962
    %2242 = vmatprep.subr.bf16.mxu0 0
    %2243 = vmatpush1.bf16.msra.mxu0 %v2021
    %2244 = vmatprep.subr.bf16.mxu0 0
    %2245 = vmatpush1.bf16.msra.mxu0 %v2022
    %2246 = vmatprep.subr.bf16.mxu0 0
    %2247 = vmatpush1.bf16.msra.mxu0 %v2023
    %2248 = vmatprep.subr.bf16.mxu0 0
    %2249 = vmatpush1.bf16.msra.mxu0 %v2024
    %2250 = vmatprep.subr.bf16.mxu0 0
    %2251 = vmatpush1.bf16.msra.mxu0 %v2025
    %2252 = vmatprep.subr.bf16.mxu0 0
    %2253 = vmatpush1.bf16.msra.mxu0 %v2026
    %2254 = vmatprep.subr.bf16.mxu0 0
    %2255 = vmatpush1.bf16.msra.mxu0 %v2027
    %2256 = vmatprep.subr.bf16.mxu0 0
    %2257 = vmatpush1.bf16.msra.mxu0 %v2028
    %2258 = vmatprep.subr.bf16.mxu0 0
    %2259 = vmatpush1.bf16.msra.mxu0 0
    %2260 = vmatprep.subr.bf16.mxu0 0
    %2261 = vmatpush1.bf16.msra.mxu0 0
    %2262 = vmatprep.subr.bf16.mxu0 0
    %2263 = vmatpush1.bf16.msra.mxu0 0
    %2264 = vmatprep.subr.bf16.mxu0 0
    %2265 = vmatpush1.bf16.msra.mxu0 0
    %2266 = vmatprep.subr.bf16.mxu0 0
    %2267 = vmatpush1.bf16.msra.mxu0 0
    %2268 = vmatprep.subr.bf16.mxu0 0
    %2269 = vmatpush1.bf16.msra.mxu0 0
    %2270 = vmatprep.subr.bf16.mxu0 0
    %2271 = vmatpush1.bf16.msra.mxu0 0
    %2272 = vmatprep.subr.bf16.mxu0 0
    %2273 = vmatpush1.bf16.msra.mxu0 0
    %2274 = vmatprep.mubr.bf16.mxu0 0
    %2275 = vmatmul.mubr.bf16.gmra.mrb[0].mxu0 %v2241
    %v2276 = vpop.f32.mrb[0].mxu0
    %v2277 = vadd.f32 %v1987, %v2276
    %v2278 = vpop.f32.mrb[0].mxu0
    %v2279 = vpop.f32.mrb[0].mxu0
    %v2280 = vpop.f32.mrb[0].mxu0
    %2281 = vdwg.mxu0
    %v2282 = vpack.c.bf16 %v1963, %v1963
    %2283 = vmatprep.subr.bf16.mxu0 0
    %2284 = vmatpush1.bf16.msra.mxu0 %v2021
    %2285 = vmatprep.subr.bf16.mxu0 0
    %2286 = vmatpush1.bf16.msra.mxu0 %v2022
    %2287 = vmatprep.subr.bf16.mxu0 0
    %2288 = vmatpush1.bf16.msra.mxu0 %v2023
    %2289 = vmatprep.subr.bf16.mxu0 0
    %2290 = vmatpush1.bf16.msra.mxu0 %v2024
    %2291 = vmatprep.subr.bf16.mxu0 0
    %2292 = vmatpush1.bf16.msra.mxu0 %v2025
    %2293 = vmatprep.subr.bf16.mxu0 0
    %2294 = vmatpush1.bf16.msra.mxu0 %v2026
    %2295 = vmatprep.subr.bf16.mxu0 0
    %2296 = vmatpush1.bf16.msra.mxu0 %v2027
    %2297 = vmatprep.subr.bf16.mxu0 0
    %2298 = vmatpush1.bf16.msra.mxu0 %v2028
    %2299 = vmatprep.subr.bf16.mxu0 0
    %2300 = vmatpush1.bf16.msra.mxu0 0
    %2301 = vmatprep.subr.bf16.mxu0 0
    %2302 = vmatpush1.bf16.msra.mxu0 0
    %2303 = vmatprep.subr.bf16.mxu0 0
    %2304 = vmatpush1.bf16.msra.mxu0 0
    %2305 = vmatprep.subr.bf16.mxu0 0
    %2306 = vmatpush1.bf16.msra.mxu0 0
    %2307 = vmatprep.subr.bf16.mxu0 0
    %2308 = vmatpush1.bf16.msra.mxu0 0
    %2309 = vmatprep.subr.bf16.mxu0 0
    %2310 = vmatpush1.bf16.msra.mxu0 0
    %2311 = vmatprep.subr.bf16.mxu0 0
    %2312 = vmatpush1.bf16.msra.mxu0 0
    %2313 = vmatprep.subr.bf16.mxu0 0
    %2314 = vmatpush1.bf16.msra.mxu0 0
    %2315 = vmatprep.mubr.bf16.mxu0 0
    %2316 = vmatmul.mubr.bf16.gmra.mrb[0].mxu0 %v2282
    %v2317 = vpop.f32.mrb[0].mxu0
    %v2318 = vadd.f32 %v1987, %v2317
    %v2319 = vpop.f32.mrb[0].mxu0
    %v2320 = vpop.f32.mrb[0].mxu0
    %v2321 = vpop.f32.mrb[0].mxu0
    %2322 = vdwg.mxu0
    %v2323 = vpack.c.bf16 %v1964, %v1964
    %2324 = vmatprep.subr.bf16.mxu0 0
    %2325 = vmatpush1.bf16.msra.mxu0 %v2021
    %2326 = vmatprep.subr.bf16.mxu0 0
    %2327 = vmatpush1.bf16.msra.mxu0 %v2022
    %2328 = vmatprep.subr.bf16.mxu0 0
    %2329 = vmatpush1.bf16.msra.mxu0 %v2023
    %2330 = vmatprep.subr.bf16.mxu0 0
    %2331 = vmatpush1.bf16.msra.mxu0 %v2024
    %2332 = vmatprep.subr.bf16.mxu0 0
    %2333 = vmatpush1.bf16.msra.mxu0 %v2025
    %2334 = vmatprep.subr.bf16.mxu0 0
    %2335 = vmatpush1.bf16.msra.mxu0 %v2026
    %2336 = vmatprep.subr.bf16.mxu0 0
    %2337 = vmatpush1.bf16.msra.mxu0 %v2027
    %2338 = vmatprep.subr.bf16.mxu0 0
    %2339 = vmatpush1.bf16.msra.mxu0 %v2028
    %2340 = vmatprep.subr.bf16.mxu0 0
    %2341 = vmatpush1.bf16.msra.mxu0 0
    %2342 = vmatprep.subr.bf16.mxu0 0
    %2343 = vmatpush1.bf16.msra.mxu0 0
    %2344 = vmatprep.subr.bf16.mxu0 0
    %2345 = vmatpush1.bf16.msra.mxu0 0
    %2346 = vmatprep.subr.bf16.mxu0 0
    %2347 = vmatpush1.bf16.msra.mxu0 0
    %2348 = vmatprep.subr.bf16.mxu0 0
    %2349 = vmatpush1.bf16.msra.mxu0 0
    %2350 = vmatprep.subr.bf16.mxu0 0
    %2351 = vmatpush1.bf16.msra.mxu0 0
    %2352 = vmatprep.subr.bf16.mxu0 0
    %2353 = vmatpush1.bf16.msra.mxu0 0
    %2354 = vmatprep.subr.bf16.mxu0 0
    %2355 = vmatpush1.bf16.msra.mxu0 0
    %2356 = vmatprep.mubr.bf16.mxu0 0
    %2357 = vmatmul.mubr.bf16.gmra.mrb[0].mxu0 %v2323
    %v2358 = vpop.f32.mrb[0].mxu0
    %v2359 = vadd.f32 %v1987, %v2358
    %v2360 = vpop.f32.mrb[0].mxu0
    %v2361 = vpop.f32.mrb[0].mxu0
    %v2362 = vpop.f32.mrb[0].mxu0
    %2363 = vdwg.mxu0
    %2365 = vrot.lane.b32.xlu0 %v2113, 32
    %v2366 = vpop.permute.xlu0 %2365
    %2369 = vrot.lane.b32.xlu0 %v2154, 64
    %v2370 = vpop.permute.xlu0 %2369
    %2373 = vrot.lane.b32.xlu0 %v2195, 96
    %v2374 = vpop.permute.xlu0 %2373
    %2377 = vrot.lane.b32.xlu0 %v2277, 32
    %v2378 = vpop.permute.xlu0 %2377
    %2381 = vrot.lane.b32.xlu0 %v2318, 64
    %v2382 = vpop.permute.xlu0 %2381
    %2385 = vrot.lane.b32.xlu0 %v2359, 96
    %v2386 = vpop.permute.xlu0 %2385
    %v2388 = vsel %vm91, %v2072, %v2366
    %vm2389 = vcmask 523264
    %v2390 = vsel %vm2389, %v2388, %v2370
    %vm2391 = vcmask 785408
    %v2392 = vsel %vm2391, %v2390, %v2374
    %v2393 = vsel %vm91, %v2236, %v2378
    %v2394 = vsel %vm2389, %v2393, %v2382
    %v2395 = vsel %vm2391, %v2394, %v2386
    %2396 = vst [vmem:[#allocation8] sm:$0xff] %v2392
    %2397 = vst [vmem:[#allocation8 + $0x8] sm:$0xff] %v2395
    %s2398 = smul.u32 0, 8
    %v2399 = vlaneseq
    %v2400 = vshrl.u32 %v2399, 7
    %v2401 = vstv %s2398
    %v2402 = vadd.s32 %v2400, %v2401
    %vm2403 = vcmp.lt.s32.totalorder %v2402, 2
    %v2404 = vsel %vm2403, 1, 0
    %v2405 = vcvt.s32.f32 %v2404
    %v2406 = vld [vmem:[%s0] sm:$0xff]
    %v2407 = vld [vmem:[%s0 + $0x8] sm:$0xff]
    %v2408 = vsub.f32 %v2392, %v2406
    %v2409 = vsub.f32 %v2395, %v2407
    %v2410 = vmul.f32 %v2408, %v2405
    %v2411 = vmul.f32 %v2409, %v2405
    %v2412 = vmul.f32 %v2410, %v2410
    %v2413 = vmul.f32 %v2411, %v2411
    %v2414 = vadd.f32 %v2412, %v2413
    %2415 = vadd.xlane.f32.xlu0 %v2414
    %v2416 = vpop.xlane.xlu0 %2415
    %v2417 = vrot.slane %v2416, 4
    %v2418 = vadd.f32 %v2416, %v2417
    %v2419 = vrot.slane %v2418, 2
    %v2420 = vadd.f32 %v2418, %v2419
    %v2421 = vrot.slane %v2420, 1
    %v2422 = vadd.f32 %v2420, %v2421
    %s2423 = vtos %v2422
    %v2424 = vstv %s2423
    %2425 = vst [vmem:[#allocation11] sm:$0x1] %v2424
    // Predicated region
    $region46: #{tpu_custom_call.1} parent=1 // pred_check
      _
    $region47: #{tpu_custom_call.1} parent=1 // pred_check_branch
      %2427 = sbr.rel (0) target = $region49
    $region48: #{tpu_custom_call.1} parent=1 // pred_region
      %s2429 = ssub.s32 256, 256
      %2430 = vsyncadd [#allocation5], %s2429
      %s2432 = sshll.u32 [#allocation8], 4
      %s2433 = int_to_ptr.vmem [resolvable:$true] %s2432
      %2435 = dma.vmem_to_hbm [thread:$0]  %s2433, 256, %s9, [#allocation5]
    $region49: #{tpu_custom_call.1} parent=1 // pred_fallthru
      _
    // Predicated region
    $region50: #{tpu_custom_call.1} parent=1 // pred_check
      _
    $region51: #{tpu_custom_call.1} parent=1 // pred_check_branch
      %2437 = sbr.rel (0) target = $region53
    $region52: #{tpu_custom_call.1} parent=1 // pred_region
      %s2439 = ssub.s32 128, 128
      %2440 = vsyncadd [#allocation10], %s2439
      %s2442 = sshll.u32 [#allocation9], 4
      %s2443 = int_to_ptr.vmem [resolvable:$true] %s2442
      %2445 = dma.vmem_to_hbm [thread:$0]  %s2443, 128, %s10, [#allocation10]
    $region53: #{tpu_custom_call.1} parent=1 // pred_fallthru
      _
    // Predicated region
    $region54: #{tpu_custom_call.1} parent=1 // pred_check
      _
    $region55: #{tpu_custom_call.1} parent=1 // pred_check_branch
      %2447 = sbr.rel (0) target = $region57
    $region56: #{tpu_custom_call.1} parent=1 // pred_region
      %s2449 = ssub.s32 16, 16
      %2450 = vsyncadd [#allocation10], %s2449
      %s2452 = sshll.u32 [#allocation11], 4
      %s2453 = int_to_ptr.vmem [resolvable:$true] %s2452
      %2455 = dma.vmem_to_hbm [thread:$0]  %s2453, 16, %s11, [#allocation10]
    $region57: #{tpu_custom_call.1} parent=1 // pred_fallthru
      _
    // Predicated region
    $region58: #{tpu_custom_call.1} parent=1 // pred_check
      _
    $region59: #{tpu_custom_call.1} parent=1 // pred_check_branch
      %2457 = sbr.rel (0) target = $region61
    $region60: #{tpu_custom_call.1} parent=1 // pred_region
      %2458 = dma.done [#allocation5], 256
    $region61: #{tpu_custom_call.1} parent=1 // pred_fallthru
      _
    // Predicated region
    $region62: #{tpu_custom_call.1} parent=1 // pred_check
      _
    $region63: #{tpu_custom_call.1} parent=1 // pred_check_branch
      %2460 = sbr.rel (0) target = $region65
    $region64: #{tpu_custom_call.1} parent=1 // pred_region
      %2461 = dma.done [#allocation10], 128
    $region65: #{tpu_custom_call.1} parent=1 // pred_fallthru
      _
    // Predicated region
    $region66: #{tpu_custom_call.1} parent=1 // pred_check
      _
    $region67: #{tpu_custom_call.1} parent=1 // pred_check_branch
      %2463 = sbr.rel (0) target = $region69
    $region68: #{tpu_custom_call.1} parent=1 // pred_region
      %2464 = dma.done [#allocation10], 16
    $region69: #{tpu_custom_call.1} parent=1 // pred_fallthru
      _
    %2465 = vsyncpa [#allocation4], 1
    %2466 = vsyncpa [#allocation7], 1
    %2467 = vsyncpa [#allocation5], 1
    %2468 = vsyncpa [#allocation10], 1

</llo_original>
